<compile_context>
chip_gen: v7x
topology: tpu7x:2x2x1
jax: 0.10.0
libtpu: 0.0.40
codegen_flags: <defaults>
</compile_context>

<pallas_src>
import jax
import jax.numpy as jnp
from jax import lax
from jax.experimental import pallas as pl
from jax.experimental.pallas import tpu as pltpu

H = 16              # image height
W = 16              # image width
NUM_FACES = 8       # faces per mesh
PIX = H * W         # 256 pixels
PIX_ROWS = PIX // 128   # 2 sublane rows of 128 lanes
EPS = 1e-8
Z_FAR = 1e10
BG_COLOR = (1.0, 1.0, 1.0)   # PyTorch3D BlendParams default background


def _render_kernel(face_ref, out_ref):
    """face_ref: SMEM (N*NUM_FACES*18,) f32 packed per-face records
                 [x0,y0,z0, x1,y1,z1, x2,y2,z2, r0,g0,b0, r1,g1,b1, r2,g2,b2]
       out_ref:  VMEM block (1, 8, 128) f32 = [red(2,128); grn; blu; alpha]."""
    b = pl.program_id(0)
    fbase = b * (NUM_FACES * 18)

    # Lane-dense pixel coordinates: 256 pixels flattened to (2, 128), p = row*W + col.
    pidx = (lax.broadcasted_iota(jnp.int32, (PIX_ROWS, 128), 0) * 128
            + lax.broadcasted_iota(jnp.int32, (PIX_ROWS, 128), 1))
    row = (pidx >> 4).astype(jnp.float32)        # W == 16 (power of two)
    col = (pidx & (W - 1)).astype(jnp.float32)
    # PyTorch3D NDC convention: +x left, +y up; image row 0 / col 0 map to +y / +x.
    px = 1.0 - (col + 0.5) * (2.0 / W)
    py = 1.0 - (row + 0.5) * (2.0 / H)

    zbuf = jnp.full((PIX_ROWS, 128), Z_FAR, dtype=jnp.float32)
    red = jnp.full((PIX_ROWS, 128), BG_COLOR[0], dtype=jnp.float32)
    grn = jnp.full((PIX_ROWS, 128), BG_COLOR[1], dtype=jnp.float32)
    blu = jnp.full((PIX_ROWS, 128), BG_COLOR[2], dtype=jnp.float32)
    alpha = jnp.zeros((PIX_ROWS, 128), dtype=jnp.float32)

    # Small fixed face count -> fully unrolled face loop (scalar reads from SMEM).
    for f in range(NUM_FACES):
        o = fbase + f * 18
        x0 = face_ref[o + 0]; y0 = face_ref[o + 1]; z0 = face_ref[o + 2]
        x1 = face_ref[o + 3]; y1 = face_ref[o + 4]; z1 = face_ref[o + 5]
        x2 = face_ref[o + 6]; y2 = face_ref[o + 7]; z2 = face_ref[o + 8]
        r0 = face_ref[o + 9]; g0 = face_ref[o + 10]; b0 = face_ref[o + 11]
        r1 = face_ref[o + 12]; g1 = face_ref[o + 13]; b1 = face_ref[o + 14]
        r2 = face_ref[o + 15]; g2 = face_ref[o + 16]; b2 = face_ref[o + 17]

        # ---- scalar-unit precompute: signed area + affine edge coefficients ----
        area = (x1 - x0) * (y2 - y0) - (y1 - y0) * (x2 - x0)
        valid = jnp.abs(area) > EPS
        inv_area = jnp.where(valid, 1.0 / jnp.where(valid, area, 1.0), 0.0)
        # w0 = A0*px + B0*py + C0 ; w1 = A1*px + B1*py + C1 ; w2 = 1 - w0 - w1
        a0 = (y1 - y2) * inv_area
        b0c = (x2 - x1) * inv_area
        c0 = jnp.where(valid, (x1 * y2 - y1 * x2) * inv_area, -1.0)  # force outside if degenerate
        a1 = (y2 - y0) * inv_area
        b1c = (x0 - x2) * inv_area
        c1 = (x2 * y0 - y2 * x0) * inv_area
        dz0 = z0 - z2; dz1 = z1 - z2
        dr0 = r0 - r2; dr1 = r1 - r2
        dg0 = g0 - g2; dg1 = g1 - g2
        db0 = b0 - b2; db1 = b1 - b2

        # ---- per-pixel vector work on lane-dense (2, 128) tiles ----
        w0 = a0 * px + b0c * py + c0
        w1 = a1 * px + b1c * py + c1
        w2 = 1.0 - w0 - w1
        inside = jnp.minimum(jnp.minimum(w0, w1), w2) >= 0.0

        z = w0 * dz0 + w1 * dz1 + z2
        # Hard z-test, faces_per_pixel = 1; z > 0 keeps faces in front of the camera.
        better = inside & (z < zbuf) & (z > 0.0)   # TODO(synk): proper znear/zfar frustum clipping

        zbuf = jnp.where(better, z, zbuf)
        red = jnp.where(better, w0 * dr0 + w1 * dr1 + r2, red)
        grn = jnp.where(better, w0 * dg0 + w1 * dg1 + g2, grn)
        blu = jnp.where(better, w0 * db0 + w1 * db1 + b2, blu)
        alpha = jnp.where(better, 1.0, alpha)

    # Single full (8,128) unmasked store: channels stacked along sublanes.
    out_ref[0] = jnp.concatenate([red, grn, blu, alpha], axis=0)


def mesh_renderer_forward(verts_ndc, faces, vert_colors):
    """MeshRenderer.forward equivalent.

    verts_ndc:   (N, V, 3) float32 — vertex x, y in NDC and z = camera depth
                 (i.e. output of the rasterizer's camera transform, done as glue).
    faces:       (F, 3) int32 vertex indices.
    vert_colors: (N, V, 3) float32 per-vertex RGB (the shader's "texture").
    Returns images of shape (N, H, W, 4) float32, matching PyTorch3D (NHWC RGBA).
    """
    N = verts_ndc.shape[0]
    F = faces.shape[0]
    assert F == NUM_FACES

    # Glue: gather per-face vertex positions/colors and pack flat per-face records.
    tri = verts_ndc[:, faces, :].reshape(N, F, 9)       # x0,y0,z0,x1,y1,z1,x2,y2,z2
    col = vert_colors[:, faces, :].reshape(N, F, 9)     # r0,g0,b0,r1,g1,b1,r2,g2,b2
    packed = jnp.concatenate([tri, col], axis=-1).astype(jnp.float32)
    packed = packed.reshape(N * F * 18)                 # flat 1-D -> tight SMEM padding

    out = pl.pallas_call(
        _render_kernel,
        out_shape=jax.ShapeDtypeStruct((N, 8, 128), jnp.float32),
        grid_spec=pltpu.PrefetchScalarGridSpec(
            num_scalar_prefetch=0,
            grid=(N,),
            in_specs=[pl.BlockSpec(memory_space=pltpu.MemorySpace.SMEM)],
            out_specs=pl.BlockSpec((1, 8, 128), lambda b: (b, 0, 0)),
        ),
        compiler_params=pltpu.CompilerParams(dimension_semantics=("parallel",)),
    )(packed)

    # (N, 8, 128) = per batch [r(256), g(256), b(256), a(256)] -> NHWC RGBA.
    images = out.reshape(N, 4, H, W)
    return jnp.transpose(images, (0, 2, 3, 1))


if __name__ == "__main__":
    key = jax.random.PRNGKey(0)
    N, V = 2, 12
    k_xy, k_z, k_col = jax.random.split(key, 3)

    # Deterministic synthetic "mesh batch": vertices already in NDC/camera space.
    xy = jax.random.uniform(k_xy, (N, V, 2), minval=-0.9, maxval=0.9)
    z = jax.random.uniform(k_z, (N, V, 1), minval=1.0, maxval=2.0)
    verts = jnp.concatenate([xy, z], axis=-1).astype(jnp.float32)
    vert_colors = jax.random.uniform(k_col, (N, V, 3)).astype(jnp.float32)
    faces = jnp.array(
        [[0, 1, 2], [3, 4, 5], [6, 7, 8], [9, 10, 11],
         [0, 2, 4], [1, 3, 5], [6, 8, 10], [7, 9, 11]],
        dtype=jnp.int32,
    )

    images = mesh_renderer_forward(verts, faces, vert_colors)
    images = jax.block_until_ready(images)

    assert images.shape == (N, H, W, 4)
    assert images.dtype == jnp.float32
    assert bool(jnp.all(jnp.isfinite(images)))
    print("KERNEL_OK")
</pallas_src>

<mosaic_0001>
module attributes {stable_mosaic.version = 11 : i64} {
  func.func @_render_kernel(%arg0: i32, %arg1: memref<288xf32, #tpu.memory_space<smem>>, %arg2: memref<1x8x128xf32, #tpu.memory_space<vmem>>) attributes {dimension_semantics = [#tpu.dimension_semantics<parallel>], iteration_bounds = array<i64: 2>, scalar_prefetch = 0 : i64, scratch_operands = 0 : i64, tpu.core_type = #tpu.core_type<tc>, window_params = [{transform_indices = @transform_0, window_bounds = array<i64: 288>}, {transform_indices = @transform_1, window_bounds = array<i64: 1, 8, 128>}]} {
    %c144_i32 = arith.constant 144 : i32
    %0 = arith.muli %arg0, %c144_i32 : i32
    %1 = tpu.iota {dimensions = array<i32: 0>} : vector<2x128xi32>
    %c128_i32 = arith.constant 128 : i32
    %2 = vector.broadcast %c128_i32 : i32 to vector<2x128xi32>
    %3 = arith.muli %1, %2 : vector<2x128xi32>
    %4 = tpu.iota {dimensions = array<i32: 1>} : vector<2x128xi32>
    %5 = arith.addi %3, %4 : vector<2x128xi32>
    %c4_i32 = arith.constant 4 : i32
    %6 = vector.broadcast %c4_i32 : i32 to vector<2x128xi32>
    %7 = arith.shrsi %5, %6 : vector<2x128xi32>
    %8 = arith.sitofp %7 : vector<2x128xi32> to vector<2x128xf32>
    %c15_i32 = arith.constant 15 : i32
    %9 = vector.broadcast %c15_i32 : i32 to vector<2x128xi32>
    %10 = arith.andi %5, %9 : vector<2x128xi32>
    %11 = arith.sitofp %10 : vector<2x128xi32> to vector<2x128xf32>
    %cst = arith.constant 5.000000e-01 : f32
    %12 = vector.broadcast %cst : f32 to vector<2x128xf32>
    %13 = arith.addf %11, %12 : vector<2x128xf32>
    %cst_0 = arith.constant 1.250000e-01 : f32
    %14 = vector.broadcast %cst_0 : f32 to vector<2x128xf32>
    %15 = arith.mulf %13, %14 : vector<2x128xf32>
    %cst_1 = arith.constant 1.000000e+00 : f32
    %16 = vector.broadcast %cst_1 : f32 to vector<2x128xf32>
    %17 = arith.subf %16, %15 : vector<2x128xf32>
    %cst_2 = arith.constant 5.000000e-01 : f32
    %18 = vector.broadcast %cst_2 : f32 to vector<2x128xf32>
    %19 = arith.addf %8, %18 : vector<2x128xf32>
    %cst_3 = arith.constant 1.250000e-01 : f32
    %20 = vector.broadcast %cst_3 : f32 to vector<2x128xf32>
    %21 = arith.mulf %19, %20 : vector<2x128xf32>
    %cst_4 = arith.constant 1.000000e+00 : f32
    %22 = vector.broadcast %cst_4 : f32 to vector<2x128xf32>
    %23 = arith.subf %22, %21 : vector<2x128xf32>
    %cst_5 = arith.constant 1.000000e+10 : f32
    %24 = vector.broadcast %cst_5 : f32 to vector<2x128xf32>
    %cst_6 = arith.constant 1.000000e+00 : f32
    %25 = vector.broadcast %cst_6 : f32 to vector<2x128xf32>
    %cst_7 = arith.constant 1.000000e+00 : f32
    %26 = vector.broadcast %cst_7 : f32 to vector<2x128xf32>
    %cst_8 = arith.constant 1.000000e+00 : f32
    %27 = vector.broadcast %cst_8 : f32 to vector<2x128xf32>
    %cst_9 = arith.constant 0.000000e+00 : f32
    %28 = vector.broadcast %cst_9 : f32 to vector<2x128xf32>
    %c0_i32 = arith.constant 0 : i32
    %29 = arith.addi %0, %c0_i32 : i32
    %c0_i32_10 = arith.constant 0 : i32
    %30 = arith.addi %29, %c0_i32_10 : i32
    %31 = arith.index_cast %30 : i32 to index
    %32 = memref.load %arg1[%31] : memref<288xf32, #tpu.memory_space<smem>>
    %c1_i32 = arith.constant 1 : i32
    %33 = arith.addi %29, %c1_i32 : i32
    %34 = arith.index_cast %33 : i32 to index
    %35 = memref.load %arg1[%34] : memref<288xf32, #tpu.memory_space<smem>>
    %c2_i32 = arith.constant 2 : i32
    %36 = arith.addi %29, %c2_i32 : i32
    %37 = arith.index_cast %36 : i32 to index
    %38 = memref.load %arg1[%37] : memref<288xf32, #tpu.memory_space<smem>>
    %c3_i32 = arith.constant 3 : i32
    %39 = arith.addi %29, %c3_i32 : i32
    %40 = arith.index_cast %39 : i32 to index
    %41 = memref.load %arg1[%40] : memref<288xf32, #tpu.memory_space<smem>>
    %c4_i32_11 = arith.constant 4 : i32
    %42 = arith.addi %29, %c4_i32_11 : i32
    %43 = arith.index_cast %42 : i32 to index
    %44 = memref.load %arg1[%43] : memref<288xf32, #tpu.memory_space<smem>>
    %c5_i32 = arith.constant 5 : i32
    %45 = arith.addi %29, %c5_i32 : i32
    %46 = arith.index_cast %45 : i32 to index
    %47 = memref.load %arg1[%46] : memref<288xf32, #tpu.memory_space<smem>>
    %c6_i32 = arith.constant 6 : i32
    %48 = arith.addi %29, %c6_i32 : i32
    %49 = arith.index_cast %48 : i32 to index
    %50 = memref.load %arg1[%49] : memref<288xf32, #tpu.memory_space<smem>>
    %c7_i32 = arith.constant 7 : i32
    %51 = arith.addi %29, %c7_i32 : i32
    %52 = arith.index_cast %51 : i32 to index
    %53 = memref.load %arg1[%52] : memref<288xf32, #tpu.memory_space<smem>>
    %c8_i32 = arith.constant 8 : i32
    %54 = arith.addi %29, %c8_i32 : i32
    %55 = arith.index_cast %54 : i32 to index
    %56 = memref.load %arg1[%55] : memref<288xf32, #tpu.memory_space<smem>>
    %c9_i32 = arith.constant 9 : i32
    %57 = arith.addi %29, %c9_i32 : i32
    %58 = arith.index_cast %57 : i32 to index
    %59 = memref.load %arg1[%58] : memref<288xf32, #tpu.memory_space<smem>>
    %c10_i32 = arith.constant 10 : i32
    %60 = arith.addi %29, %c10_i32 : i32
    %61 = arith.index_cast %60 : i32 to index
    %62 = memref.load %arg1[%61] : memref<288xf32, #tpu.memory_space<smem>>
    %c11_i32 = arith.constant 11 : i32
    %63 = arith.addi %29, %c11_i32 : i32
    %64 = arith.index_cast %63 : i32 to index
    %65 = memref.load %arg1[%64] : memref<288xf32, #tpu.memory_space<smem>>
    %c12_i32 = arith.constant 12 : i32
    %66 = arith.addi %29, %c12_i32 : i32
    %67 = arith.index_cast %66 : i32 to index
    %68 = memref.load %arg1[%67] : memref<288xf32, #tpu.memory_space<smem>>
    %c13_i32 = arith.constant 13 : i32
    %69 = arith.addi %29, %c13_i32 : i32
    %70 = arith.index_cast %69 : i32 to index
    %71 = memref.load %arg1[%70] : memref<288xf32, #tpu.memory_space<smem>>
    %c14_i32 = arith.constant 14 : i32
    %72 = arith.addi %29, %c14_i32 : i32
    %73 = arith.index_cast %72 : i32 to index
    %74 = memref.load %arg1[%73] : memref<288xf32, #tpu.memory_space<smem>>
    %c15_i32_12 = arith.constant 15 : i32
    %75 = arith.addi %29, %c15_i32_12 : i32
    %76 = arith.index_cast %75 : i32 to index
    %77 = memref.load %arg1[%76] : memref<288xf32, #tpu.memory_space<smem>>
    %c16_i32 = arith.constant 16 : i32
    %78 = arith.addi %29, %c16_i32 : i32
    %79 = arith.index_cast %78 : i32 to index
    %80 = memref.load %arg1[%79] : memref<288xf32, #tpu.memory_space<smem>>
    %c17_i32 = arith.constant 17 : i32
    %81 = arith.addi %29, %c17_i32 : i32
    %82 = arith.index_cast %81 : i32 to index
    %83 = memref.load %arg1[%82] : memref<288xf32, #tpu.memory_space<smem>>
    %84 = arith.subf %41, %32 : f32
    %85 = arith.subf %53, %35 : f32
    %86 = arith.mulf %84, %85 : f32
    %87 = arith.subf %44, %35 : f32
    %88 = arith.subf %50, %32 : f32
    %89 = arith.mulf %87, %88 : f32
    %90 = arith.subf %86, %89 : f32
    %91 = math.absf %90 : f32
    %cst_13 = arith.constant 9.99999993E-9 : f32
    %92 = arith.cmpf ogt, %91, %cst_13 : f32
    %cst_14 = arith.constant 1.000000e+00 : f32
    %93 = arith.select %92, %90, %cst_14 : f32
    %cst_15 = arith.constant 1.000000e+00 : f32
    %94 = arith.divf %cst_15, %93 : f32
    %cst_16 = arith.constant 0.000000e+00 : f32
    %95 = arith.select %92, %94, %cst_16 : f32
    %96 = arith.subf %44, %53 : f32
    %97 = arith.mulf %96, %95 : f32
    %98 = arith.subf %50, %41 : f32
    %99 = arith.mulf %98, %95 : f32
    %100 = arith.mulf %41, %53 : f32
    %101 = arith.mulf %44, %50 : f32
    %102 = arith.subf %100, %101 : f32
    %103 = arith.mulf %102, %95 : f32
    %cst_17 = arith.constant -1.000000e+00 : f32
    %104 = arith.select %92, %103, %cst_17 : f32
    %105 = arith.subf %53, %35 : f32
    %106 = arith.mulf %105, %95 : f32
    %107 = arith.subf %32, %50 : f32
    %108 = arith.mulf %107, %95 : f32
    %109 = arith.mulf %50, %35 : f32
    %110 = arith.mulf %53, %32 : f32
    %111 = arith.subf %109, %110 : f32
    %112 = arith.mulf %111, %95 : f32
    %113 = arith.subf %38, %56 : f32
    %114 = arith.subf %47, %56 : f32
    %115 = arith.subf %59, %77 : f32
    %116 = arith.subf %68, %77 : f32
    %117 = arith.subf %62, %80 : f32
    %118 = arith.subf %71, %80 : f32
    %119 = arith.subf %65, %83 : f32
    %120 = arith.subf %74, %83 : f32
    %121 = vector.broadcast %97 : f32 to vector<2x128xf32>
    %122 = arith.mulf %121, %17 : vector<2x128xf32>
    %123 = vector.broadcast %99 : f32 to vector<2x128xf32>
    %124 = arith.mulf %123, %23 : vector<2x128xf32>
    %125 = arith.addf %122, %124 : vector<2x128xf32>
    %126 = vector.broadcast %104 : f32 to vector<2x128xf32>
    %127 = arith.addf %125, %126 : vector<2x128xf32>
    %128 = vector.broadcast %106 : f32 to vector<2x128xf32>
    %129 = arith.mulf %128, %17 : vector<2x128xf32>
    %130 = vector.broadcast %108 : f32 to vector<2x128xf32>
    %131 = arith.mulf %130, %23 : vector<2x128xf32>
    %132 = arith.addf %129, %131 : vector<2x128xf32>
    %133 = vector.broadcast %112 : f32 to vector<2x128xf32>
    %134 = arith.addf %132, %133 : vector<2x128xf32>
    %cst_18 = arith.constant 1.000000e+00 : f32
    %135 = vector.broadcast %cst_18 : f32 to vector<2x128xf32>
    %136 = arith.subf %135, %127 : vector<2x128xf32>
    %137 = arith.subf %136, %134 : vector<2x128xf32>
    %138 = arith.minimumf %127, %134 : vector<2x128xf32>
    %139 = arith.minimumf %138, %137 : vector<2x128xf32>
    %cst_19 = arith.constant 0.000000e+00 : f32
    %140 = vector.broadcast %cst_19 : f32 to vector<2x128xf32>
    %141 = arith.cmpf oge, %139, %140 : vector<2x128xf32>
    %142 = vector.broadcast %113 : f32 to vector<2x128xf32>
    %143 = arith.mulf %127, %142 : vector<2x128xf32>
    %144 = vector.broadcast %114 : f32 to vector<2x128xf32>
    %145 = arith.mulf %134, %144 : vector<2x128xf32>
    %146 = arith.addf %143, %145 : vector<2x128xf32>
    %147 = vector.broadcast %56 : f32 to vector<2x128xf32>
    %148 = arith.addf %146, %147 : vector<2x128xf32>
    %149 = arith.cmpf olt, %148, %24 : vector<2x128xf32>
    %150 = arith.andi %141, %149 : vector<2x128xi1>
    %cst_20 = arith.constant 0.000000e+00 : f32
    %151 = vector.broadcast %cst_20 : f32 to vector<2x128xf32>
    %152 = arith.cmpf ogt, %148, %151 : vector<2x128xf32>
    %153 = arith.andi %150, %152 : vector<2x128xi1>
    %154 = arith.select %153, %148, %24 : vector<2x128xi1>, vector<2x128xf32>
    %155 = vector.broadcast %115 : f32 to vector<2x128xf32>
    %156 = arith.mulf %127, %155 : vector<2x128xf32>
    %157 = vector.broadcast %116 : f32 to vector<2x128xf32>
    %158 = arith.mulf %134, %157 : vector<2x128xf32>
    %159 = arith.addf %156, %158 : vector<2x128xf32>
    %160 = vector.broadcast %77 : f32 to vector<2x128xf32>
    %161 = arith.addf %159, %160 : vector<2x128xf32>
    %162 = arith.select %153, %161, %25 : vector<2x128xi1>, vector<2x128xf32>
    %163 = vector.broadcast %117 : f32 to vector<2x128xf32>
    %164 = arith.mulf %127, %163 : vector<2x128xf32>
    %165 = vector.broadcast %118 : f32 to vector<2x128xf32>
    %166 = arith.mulf %134, %165 : vector<2x128xf32>
    %167 = arith.addf %164, %166 : vector<2x128xf32>
    %168 = vector.broadcast %80 : f32 to vector<2x128xf32>
    %169 = arith.addf %167, %168 : vector<2x128xf32>
    %170 = arith.select %153, %169, %26 : vector<2x128xi1>, vector<2x128xf32>
    %171 = vector.broadcast %119 : f32 to vector<2x128xf32>
    %172 = arith.mulf %127, %171 : vector<2x128xf32>
    %173 = vector.broadcast %120 : f32 to vector<2x128xf32>
    %174 = arith.mulf %134, %173 : vector<2x128xf32>
    %175 = arith.addf %172, %174 : vector<2x128xf32>
    %176 = vector.broadcast %83 : f32 to vector<2x128xf32>
    %177 = arith.addf %175, %176 : vector<2x128xf32>
    %178 = arith.select %153, %177, %27 : vector<2x128xi1>, vector<2x128xf32>
    %cst_21 = arith.constant 1.000000e+00 : f32
    %179 = vector.broadcast %cst_21 : f32 to vector<2x128xf32>
    %180 = arith.select %153, %179, %28 : vector<2x128xi1>, vector<2x128xf32>
    %c18_i32 = arith.constant 18 : i32
    %181 = arith.addi %0, %c18_i32 : i32
    %c0_i32_22 = arith.constant 0 : i32
    %182 = arith.addi %181, %c0_i32_22 : i32
    %183 = arith.index_cast %182 : i32 to index
    %184 = memref.load %arg1[%183] : memref<288xf32, #tpu.memory_space<smem>>
    %c1_i32_23 = arith.constant 1 : i32
    %185 = arith.addi %181, %c1_i32_23 : i32
    %186 = arith.index_cast %185 : i32 to index
    %187 = memref.load %arg1[%186] : memref<288xf32, #tpu.memory_space<smem>>
    %c2_i32_24 = arith.constant 2 : i32
    %188 = arith.addi %181, %c2_i32_24 : i32
    %189 = arith.index_cast %188 : i32 to index
    %190 = memref.load %arg1[%189] : memref<288xf32, #tpu.memory_space<smem>>
    %c3_i32_25 = arith.constant 3 : i32
    %191 = arith.addi %181, %c3_i32_25 : i32
    %192 = arith.index_cast %191 : i32 to index
    %193 = memref.load %arg1[%192] : memref<288xf32, #tpu.memory_space<smem>>
    %c4_i32_26 = arith.constant 4 : i32
    %194 = arith.addi %181, %c4_i32_26 : i32
    %195 = arith.index_cast %194 : i32 to index
    %196 = memref.load %arg1[%195] : memref<288xf32, #tpu.memory_space<smem>>
    %c5_i32_27 = arith.constant 5 : i32
    %197 = arith.addi %181, %c5_i32_27 : i32
    %198 = arith.index_cast %197 : i32 to index
    %199 = memref.load %arg1[%198] : memref<288xf32, #tpu.memory_space<smem>>
    %c6_i32_28 = arith.constant 6 : i32
    %200 = arith.addi %181, %c6_i32_28 : i32
    %201 = arith.index_cast %200 : i32 to index
    %202 = memref.load %arg1[%201] : memref<288xf32, #tpu.memory_space<smem>>
    %c7_i32_29 = arith.constant 7 : i32
    %203 = arith.addi %181, %c7_i32_29 : i32
    %204 = arith.index_cast %203 : i32 to index
    %205 = memref.load %arg1[%204] : memref<288xf32, #tpu.memory_space<smem>>
    %c8_i32_30 = arith.constant 8 : i32
    %206 = arith.addi %181, %c8_i32_30 : i32
    %207 = arith.index_cast %206 : i32 to index
    %208 = memref.load %arg1[%207] : memref<288xf32, #tpu.memory_space<smem>>
    %c9_i32_31 = arith.constant 9 : i32
    %209 = arith.addi %181, %c9_i32_31 : i32
    %210 = arith.index_cast %209 : i32 to index
    %211 = memref.load %arg1[%210] : memref<288xf32, #tpu.memory_space<smem>>
    %c10_i32_32 = arith.constant 10 : i32
    %212 = arith.addi %181, %c10_i32_32 : i32
    %213 = arith.index_cast %212 : i32 to index
    %214 = memref.load %arg1[%213] : memref<288xf32, #tpu.memory_space<smem>>
    %c11_i32_33 = arith.constant 11 : i32
    %215 = arith.addi %181, %c11_i32_33 : i32
    %216 = arith.index_cast %215 : i32 to index
    %217 = memref.load %arg1[%216] : memref<288xf32, #tpu.memory_space<smem>>
    %c12_i32_34 = arith.constant 12 : i32
    %218 = arith.addi %181, %c12_i32_34 : i32
    %219 = arith.index_cast %218 : i32 to index
    %220 = memref.load %arg1[%219] : memref<288xf32, #tpu.memory_space<smem>>
    %c13_i32_35 = arith.constant 13 : i32
    %221 = arith.addi %181, %c13_i32_35 : i32
    %222 = arith.index_cast %221 : i32 to index
    %223 = memref.load %arg1[%222] : memref<288xf32, #tpu.memory_space<smem>>
    %c14_i32_36 = arith.constant 14 : i32
    %224 = arith.addi %181, %c14_i32_36 : i32
    %225 = arith.index_cast %224 : i32 to index
    %226 = memref.load %arg1[%225] : memref<288xf32, #tpu.memory_space<smem>>
    %c15_i32_37 = arith.constant 15 : i32
    %227 = arith.addi %181, %c15_i32_37 : i32
    %228 = arith.index_cast %227 : i32 to index
    %229 = memref.load %arg1[%228] : memref<288xf32, #tpu.memory_space<smem>>
    %c16_i32_38 = arith.constant 16 : i32
    %230 = arith.addi %181, %c16_i32_38 : i32
    %231 = arith.index_cast %230 : i32 to index
    %232 = memref.load %arg1[%231] : memref<288xf32, #tpu.memory_space<smem>>
    %c17_i32_39 = arith.constant 17 : i32
    %233 = arith.addi %181, %c17_i32_39 : i32
    %234 = arith.index_cast %233 : i32 to index
    %235 = memref.load %arg1[%234] : memref<288xf32, #tpu.memory_space<smem>>
    %236 = arith.subf %193, %184 : f32
    %237 = arith.subf %205, %187 : f32
    %238 = arith.mulf %236, %237 : f32
    %239 = arith.subf %196, %187 : f32
    %240 = arith.subf %202, %184 : f32
    %241 = arith.mulf %239, %240 : f32
    %242 = arith.subf %238, %241 : f32
    %243 = math.absf %242 : f32
    %cst_40 = arith.constant 9.99999993E-9 : f32
    %244 = arith.cmpf ogt, %243, %cst_40 : f32
    %cst_41 = arith.constant 1.000000e+00 : f32
    %245 = arith.select %244, %242, %cst_41 : f32
    %cst_42 = arith.constant 1.000000e+00 : f32
    %246 = arith.divf %cst_42, %245 : f32
    %cst_43 = arith.constant 0.000000e+00 : f32
    %247 = arith.select %244, %246, %cst_43 : f32
    %248 = arith.subf %196, %205 : f32
    %249 = arith.mulf %248, %247 : f32
    %250 = arith.subf %202, %193 : f32
    %251 = arith.mulf %250, %247 : f32
    %252 = arith.mulf %193, %205 : f32
    %253 = arith.mulf %196, %202 : f32
    %254 = arith.subf %252, %253 : f32
    %255 = arith.mulf %254, %247 : f32
    %cst_44 = arith.constant -1.000000e+00 : f32
    %256 = arith.select %244, %255, %cst_44 : f32
    %257 = arith.subf %205, %187 : f32
    %258 = arith.mulf %257, %247 : f32
    %259 = arith.subf %184, %202 : f32
    %260 = arith.mulf %259, %247 : f32
    %261 = arith.mulf %202, %187 : f32
    %262 = arith.mulf %205, %184 : f32
    %263 = arith.subf %261, %262 : f32
    %264 = arith.mulf %263, %247 : f32
    %265 = arith.subf %190, %208 : f32
    %266 = arith.subf %199, %208 : f32
    %267 = arith.subf %211, %229 : f32
    %268 = arith.subf %220, %229 : f32
    %269 = arith.subf %214, %232 : f32
    %270 = arith.subf %223, %232 : f32
    %271 = arith.subf %217, %235 : f32
    %272 = arith.subf %226, %235 : f32
    %273 = vector.broadcast %249 : f32 to vector<2x128xf32>
    %274 = arith.mulf %273, %17 : vector<2x128xf32>
    %275 = vector.broadcast %251 : f32 to vector<2x128xf32>
    %276 = arith.mulf %275, %23 : vector<2x128xf32>
    %277 = arith.addf %274, %276 : vector<2x128xf32>
    %278 = vector.broadcast %256 : f32 to vector<2x128xf32>
    %279 = arith.addf %277, %278 : vector<2x128xf32>
    %280 = vector.broadcast %258 : f32 to vector<2x128xf32>
    %281 = arith.mulf %280, %17 : vector<2x128xf32>
    %282 = vector.broadcast %260 : f32 to vector<2x128xf32>
    %283 = arith.mulf %282, %23 : vector<2x128xf32>
    %284 = arith.addf %281, %283 : vector<2x128xf32>
    %285 = vector.broadcast %264 : f32 to vector<2x128xf32>
    %286 = arith.addf %284, %285 : vector<2x128xf32>
    %cst_45 = arith.constant 1.000000e+00 : f32
    %287 = vector.broadcast %cst_45 : f32 to vector<2x128xf32>
    %288 = arith.subf %287, %279 : vector<2x128xf32>
    %289 = arith.subf %288, %286 : vector<2x128xf32>
    %290 = arith.minimumf %279, %286 : vector<2x128xf32>
    %291 = arith.minimumf %290, %289 : vector<2x128xf32>
    %cst_46 = arith.constant 0.000000e+00 : f32
    %292 = vector.broadcast %cst_46 : f32 to vector<2x128xf32>
    %293 = arith.cmpf oge, %291, %292 : vector<2x128xf32>
    %294 = vector.broadcast %265 : f32 to vector<2x128xf32>
    %295 = arith.mulf %279, %294 : vector<2x128xf32>
    %296 = vector.broadcast %266 : f32 to vector<2x128xf32>
    %297 = arith.mulf %286, %296 : vector<2x128xf32>
    %298 = arith.addf %295, %297 : vector<2x128xf32>
    %299 = vector.broadcast %208 : f32 to vector<2x128xf32>
    %300 = arith.addf %298, %299 : vector<2x128xf32>
    %301 = arith.cmpf olt, %300, %154 : vector<2x128xf32>
    %302 = arith.andi %293, %301 : vector<2x128xi1>
    %cst_47 = arith.constant 0.000000e+00 : f32
    %303 = vector.broadcast %cst_47 : f32 to vector<2x128xf32>
    %304 = arith.cmpf ogt, %300, %303 : vector<2x128xf32>
    %305 = arith.andi %302, %304 : vector<2x128xi1>
    %306 = arith.select %305, %300, %154 : vector<2x128xi1>, vector<2x128xf32>
    %307 = vector.broadcast %267 : f32 to vector<2x128xf32>
    %308 = arith.mulf %279, %307 : vector<2x128xf32>
    %309 = vector.broadcast %268 : f32 to vector<2x128xf32>
    %310 = arith.mulf %286, %309 : vector<2x128xf32>
    %311 = arith.addf %308, %310 : vector<2x128xf32>
    %312 = vector.broadcast %229 : f32 to vector<2x128xf32>
    %313 = arith.addf %311, %312 : vector<2x128xf32>
    %314 = arith.select %305, %313, %162 : vector<2x128xi1>, vector<2x128xf32>
    %315 = vector.broadcast %269 : f32 to vector<2x128xf32>
    %316 = arith.mulf %279, %315 : vector<2x128xf32>
    %317 = vector.broadcast %270 : f32 to vector<2x128xf32>
    %318 = arith.mulf %286, %317 : vector<2x128xf32>
    %319 = arith.addf %316, %318 : vector<2x128xf32>
    %320 = vector.broadcast %232 : f32 to vector<2x128xf32>
    %321 = arith.addf %319, %320 : vector<2x128xf32>
    %322 = arith.select %305, %321, %170 : vector<2x128xi1>, vector<2x128xf32>
    %323 = vector.broadcast %271 : f32 to vector<2x128xf32>
    %324 = arith.mulf %279, %323 : vector<2x128xf32>
    %325 = vector.broadcast %272 : f32 to vector<2x128xf32>
    %326 = arith.mulf %286, %325 : vector<2x128xf32>
    %327 = arith.addf %324, %326 : vector<2x128xf32>
    %328 = vector.broadcast %235 : f32 to vector<2x128xf32>
    %329 = arith.addf %327, %328 : vector<2x128xf32>
    %330 = arith.select %305, %329, %178 : vector<2x128xi1>, vector<2x128xf32>
    %cst_48 = arith.constant 1.000000e+00 : f32
    %331 = vector.broadcast %cst_48 : f32 to vector<2x128xf32>
    %332 = arith.select %305, %331, %180 : vector<2x128xi1>, vector<2x128xf32>
    %c36_i32 = arith.constant 36 : i32
    %333 = arith.addi %0, %c36_i32 : i32
    %c0_i32_49 = arith.constant 0 : i32
    %334 = arith.addi %333, %c0_i32_49 : i32
    %335 = arith.index_cast %334 : i32 to index
    %336 = memref.load %arg1[%335] : memref<288xf32, #tpu.memory_space<smem>>
    %c1_i32_50 = arith.constant 1 : i32
    %337 = arith.addi %333, %c1_i32_50 : i32
    %338 = arith.index_cast %337 : i32 to index
    %339 = memref.load %arg1[%338] : memref<288xf32, #tpu.memory_space<smem>>
    %c2_i32_51 = arith.constant 2 : i32
    %340 = arith.addi %333, %c2_i32_51 : i32
    %341 = arith.index_cast %340 : i32 to index
    %342 = memref.load %arg1[%341] : memref<288xf32, #tpu.memory_space<smem>>
    %c3_i32_52 = arith.constant 3 : i32
    %343 = arith.addi %333, %c3_i32_52 : i32
    %344 = arith.index_cast %343 : i32 to index
    %345 = memref.load %arg1[%344] : memref<288xf32, #tpu.memory_space<smem>>
    %c4_i32_53 = arith.constant 4 : i32
    %346 = arith.addi %333, %c4_i32_53 : i32
    %347 = arith.index_cast %346 : i32 to index
    %348 = memref.load %arg1[%347] : memref<288xf32, #tpu.memory_space<smem>>
    %c5_i32_54 = arith.constant 5 : i32
    %349 = arith.addi %333, %c5_i32_54 : i32
    %350 = arith.index_cast %349 : i32 to index
    %351 = memref.load %arg1[%350] : memref<288xf32, #tpu.memory_space<smem>>
    %c6_i32_55 = arith.constant 6 : i32
    %352 = arith.addi %333, %c6_i32_55 : i32
    %353 = arith.index_cast %352 : i32 to index
    %354 = memref.load %arg1[%353] : memref<288xf32, #tpu.memory_space<smem>>
    %c7_i32_56 = arith.constant 7 : i32
    %355 = arith.addi %333, %c7_i32_56 : i32
    %356 = arith.index_cast %355 : i32 to index
    %357 = memref.load %arg1[%356] : memref<288xf32, #tpu.memory_space<smem>>
    %c8_i32_57 = arith.constant 8 : i32
    %358 = arith.addi %333, %c8_i32_57 : i32
    %359 = arith.index_cast %358 : i32 to index
    %360 = memref.load %arg1[%359] : memref<288xf32, #tpu.memory_space<smem>>
    %c9_i32_58 = arith.constant 9 : i32
    %361 = arith.addi %333, %c9_i32_58 : i32
    %362 = arith.index_cast %361 : i32 to index
    %363 = memref.load %arg1[%362] : memref<288xf32, #tpu.memory_space<smem>>
    %c10_i32_59 = arith.constant 10 : i32
    %364 = arith.addi %333, %c10_i32_59 : i32
    %365 = arith.index_cast %364 : i32 to index
    %366 = memref.load %arg1[%365] : memref<288xf32, #tpu.memory_space<smem>>
    %c11_i32_60 = arith.constant 11 : i32
    %367 = arith.addi %333, %c11_i32_60 : i32
    %368 = arith.index_cast %367 : i32 to index
    %369 = memref.load %arg1[%368] : memref<288xf32, #tpu.memory_space<smem>>
    %c12_i32_61 = arith.constant 12 : i32
    %370 = arith.addi %333, %c12_i32_61 : i32
    %371 = arith.index_cast %370 : i32 to index
    %372 = memref.load %arg1[%371] : memref<288xf32, #tpu.memory_space<smem>>
    %c13_i32_62 = arith.constant 13 : i32
    %373 = arith.addi %333, %c13_i32_62 : i32
    %374 = arith.index_cast %373 : i32 to index
    %375 = memref.load %arg1[%374] : memref<288xf32, #tpu.memory_space<smem>>
    %c14_i32_63 = arith.constant 14 : i32
    %376 = arith.addi %333, %c14_i32_63 : i32
    %377 = arith.index_cast %376 : i32 to index
    %378 = memref.load %arg1[%377] : memref<288xf32, #tpu.memory_space<smem>>
    %c15_i32_64 = arith.constant 15 : i32
    %379 = arith.addi %333, %c15_i32_64 : i32
    %380 = arith.index_cast %379 : i32 to index
    %381 = memref.load %arg1[%380] : memref<288xf32, #tpu.memory_space<smem>>
    %c16_i32_65 = arith.constant 16 : i32
    %382 = arith.addi %333, %c16_i32_65 : i32
    %383 = arith.index_cast %382 : i32 to index
    %384 = memref.load %arg1[%383] : memref<288xf32, #tpu.memory_space<smem>>
    %c17_i32_66 = arith.constant 17 : i32
    %385 = arith.addi %333, %c17_i32_66 : i32
    %386 = arith.index_cast %385 : i32 to index
    %387 = memref.load %arg1[%386] : memref<288xf32, #tpu.memory_space<smem>>
    %388 = arith.subf %345, %336 : f32
    %389 = arith.subf %357, %339 : f32
    %390 = arith.mulf %388, %389 : f32
    %391 = arith.subf %348, %339 : f32
    %392 = arith.subf %354, %336 : f32
    %393 = arith.mulf %391, %392 : f32
    %394 = arith.subf %390, %393 : f32
    %395 = math.absf %394 : f32
    %cst_67 = arith.constant 9.99999993E-9 : f32
    %396 = arith.cmpf ogt, %395, %cst_67 : f32
    %cst_68 = arith.constant 1.000000e+00 : f32
    %397 = arith.select %396, %394, %cst_68 : f32
    %cst_69 = arith.constant 1.000000e+00 : f32
    %398 = arith.divf %cst_69, %397 : f32
    %cst_70 = arith.constant 0.000000e+00 : f32
    %399 = arith.select %396, %398, %cst_70 : f32
    %400 = arith.subf %348, %357 : f32
    %401 = arith.mulf %400, %399 : f32
    %402 = arith.subf %354, %345 : f32
    %403 = arith.mulf %402, %399 : f32
    %404 = arith.mulf %345, %357 : f32
    %405 = arith.mulf %348, %354 : f32
    %406 = arith.subf %404, %405 : f32
    %407 = arith.mulf %406, %399 : f32
    %cst_71 = arith.constant -1.000000e+00 : f32
    %408 = arith.select %396, %407, %cst_71 : f32
    %409 = arith.subf %357, %339 : f32
    %410 = arith.mulf %409, %399 : f32
    %411 = arith.subf %336, %354 : f32
    %412 = arith.mulf %411, %399 : f32
    %413 = arith.mulf %354, %339 : f32
    %414 = arith.mulf %357, %336 : f32
    %415 = arith.subf %413, %414 : f32
    %416 = arith.mulf %415, %399 : f32
    %417 = arith.subf %342, %360 : f32
    %418 = arith.subf %351, %360 : f32
    %419 = arith.subf %363, %381 : f32
    %420 = arith.subf %372, %381 : f32
    %421 = arith.subf %366, %384 : f32
    %422 = arith.subf %375, %384 : f32
    %423 = arith.subf %369, %387 : f32
    %424 = arith.subf %378, %387 : f32
    %425 = vector.broadcast %401 : f32 to vector<2x128xf32>
    %426 = arith.mulf %425, %17 : vector<2x128xf32>
    %427 = vector.broadcast %403 : f32 to vector<2x128xf32>
    %428 = arith.mulf %427, %23 : vector<2x128xf32>
    %429 = arith.addf %426, %428 : vector<2x128xf32>
    %430 = vector.broadcast %408 : f32 to vector<2x128xf32>
    %431 = arith.addf %429, %430 : vector<2x128xf32>
    %432 = vector.broadcast %410 : f32 to vector<2x128xf32>
    %433 = arith.mulf %432, %17 : vector<2x128xf32>
    %434 = vector.broadcast %412 : f32 to vector<2x128xf32>
    %435 = arith.mulf %434, %23 : vector<2x128xf32>
    %436 = arith.addf %433, %435 : vector<2x128xf32>
    %437 = vector.broadcast %416 : f32 to vector<2x128xf32>
    %438 = arith.addf %436, %437 : vector<2x128xf32>
    %cst_72 = arith.constant 1.000000e+00 : f32
    %439 = vector.broadcast %cst_72 : f32 to vector<2x128xf32>
    %440 = arith.subf %439, %431 : vector<2x128xf32>
    %441 = arith.subf %440, %438 : vector<2x128xf32>
    %442 = arith.minimumf %431, %438 : vector<2x128xf32>
    %443 = arith.minimumf %442, %441 : vector<2x128xf32>
    %cst_73 = arith.constant 0.000000e+00 : f32
    %444 = vector.broadcast %cst_73 : f32 to vector<2x128xf32>
    %445 = arith.cmpf oge, %443, %444 : vector<2x128xf32>
    %446 = vector.broadcast %417 : f32 to vector<2x128xf32>
    %447 = arith.mulf %431, %446 : vector<2x128xf32>
    %448 = vector.broadcast %418 : f32 to vector<2x128xf32>
    %449 = arith.mulf %438, %448 : vector<2x128xf32>
    %450 = arith.addf %447, %449 : vector<2x128xf32>
    %451 = vector.broadcast %360 : f32 to vector<2x128xf32>
    %452 = arith.addf %450, %451 : vector<2x128xf32>
    %453 = arith.cmpf olt, %452, %306 : vector<2x128xf32>
    %454 = arith.andi %445, %453 : vector<2x128xi1>
    %cst_74 = arith.constant 0.000000e+00 : f32
    %455 = vector.broadcast %cst_74 : f32 to vector<2x128xf32>
    %456 = arith.cmpf ogt, %452, %455 : vector<2x128xf32>
    %457 = arith.andi %454, %456 : vector<2x128xi1>
    %458 = arith.select %457, %452, %306 : vector<2x128xi1>, vector<2x128xf32>
    %459 = vector.broadcast %419 : f32 to vector<2x128xf32>
    %460 = arith.mulf %431, %459 : vector<2x128xf32>
    %461 = vector.broadcast %420 : f32 to vector<2x128xf32>
    %462 = arith.mulf %438, %461 : vector<2x128xf32>
    %463 = arith.addf %460, %462 : vector<2x128xf32>
    %464 = vector.broadcast %381 : f32 to vector<2x128xf32>
    %465 = arith.addf %463, %464 : vector<2x128xf32>
    %466 = arith.select %457, %465, %314 : vector<2x128xi1>, vector<2x128xf32>
    %467 = vector.broadcast %421 : f32 to vector<2x128xf32>
    %468 = arith.mulf %431, %467 : vector<2x128xf32>
    %469 = vector.broadcast %422 : f32 to vector<2x128xf32>
    %470 = arith.mulf %438, %469 : vector<2x128xf32>
    %471 = arith.addf %468, %470 : vector<2x128xf32>
    %472 = vector.broadcast %384 : f32 to vector<2x128xf32>
    %473 = arith.addf %471, %472 : vector<2x128xf32>
    %474 = arith.select %457, %473, %322 : vector<2x128xi1>, vector<2x128xf32>
    %475 = vector.broadcast %423 : f32 to vector<2x128xf32>
    %476 = arith.mulf %431, %475 : vector<2x128xf32>
    %477 = vector.broadcast %424 : f32 to vector<2x128xf32>
    %478 = arith.mulf %438, %477 : vector<2x128xf32>
    %479 = arith.addf %476, %478 : vector<2x128xf32>
    %480 = vector.broadcast %387 : f32 to vector<2x128xf32>
    %481 = arith.addf %479, %480 : vector<2x128xf32>
    %482 = arith.select %457, %481, %330 : vector<2x128xi1>, vector<2x128xf32>
    %cst_75 = arith.constant 1.000000e+00 : f32
    %483 = vector.broadcast %cst_75 : f32 to vector<2x128xf32>
    %484 = arith.select %457, %483, %332 : vector<2x128xi1>, vector<2x128xf32>
    %c54_i32 = arith.constant 54 : i32
    %485 = arith.addi %0, %c54_i32 : i32
    %c0_i32_76 = arith.constant 0 : i32
    %486 = arith.addi %485, %c0_i32_76 : i32
    %487 = arith.index_cast %486 : i32 to index
    %488 = memref.load %arg1[%487] : memref<288xf32, #tpu.memory_space<smem>>
    %c1_i32_77 = arith.constant 1 : i32
    %489 = arith.addi %485, %c1_i32_77 : i32
    %490 = arith.index_cast %489 : i32 to index
    %491 = memref.load %arg1[%490] : memref<288xf32, #tpu.memory_space<smem>>
    %c2_i32_78 = arith.constant 2 : i32
    %492 = arith.addi %485, %c2_i32_78 : i32
    %493 = arith.index_cast %492 : i32 to index
    %494 = memref.load %arg1[%493] : memref<288xf32, #tpu.memory_space<smem>>
    %c3_i32_79 = arith.constant 3 : i32
    %495 = arith.addi %485, %c3_i32_79 : i32
    %496 = arith.index_cast %495 : i32 to index
    %497 = memref.load %arg1[%496] : memref<288xf32, #tpu.memory_space<smem>>
    %c4_i32_80 = arith.constant 4 : i32
    %498 = arith.addi %485, %c4_i32_80 : i32
    %499 = arith.index_cast %498 : i32 to index
    %500 = memref.load %arg1[%499] : memref<288xf32, #tpu.memory_space<smem>>
    %c5_i32_81 = arith.constant 5 : i32
    %501 = arith.addi %485, %c5_i32_81 : i32
    %502 = arith.index_cast %501 : i32 to index
    %503 = memref.load %arg1[%502] : memref<288xf32, #tpu.memory_space<smem>>
    %c6_i32_82 = arith.constant 6 : i32
    %504 = arith.addi %485, %c6_i32_82 : i32
    %505 = arith.index_cast %504 : i32 to index
    %506 = memref.load %arg1[%505] : memref<288xf32, #tpu.memory_space<smem>>
    %c7_i32_83 = arith.constant 7 : i32
    %507 = arith.addi %485, %c7_i32_83 : i32
    %508 = arith.index_cast %507 : i32 to index
    %509 = memref.load %arg1[%508] : memref<288xf32, #tpu.memory_space<smem>>
    %c8_i32_84 = arith.constant 8 : i32
    %510 = arith.addi %485, %c8_i32_84 : i32
    %511 = arith.index_cast %510 : i32 to index
    %512 = memref.load %arg1[%511] : memref<288xf32, #tpu.memory_space<smem>>
    %c9_i32_85 = arith.constant 9 : i32
    %513 = arith.addi %485, %c9_i32_85 : i32
    %514 = arith.index_cast %513 : i32 to index
    %515 = memref.load %arg1[%514] : memref<288xf32, #tpu.memory_space<smem>>
    %c10_i32_86 = arith.constant 10 : i32
    %516 = arith.addi %485, %c10_i32_86 : i32
    %517 = arith.index_cast %516 : i32 to index
    %518 = memref.load %arg1[%517] : memref<288xf32, #tpu.memory_space<smem>>
    %c11_i32_87 = arith.constant 11 : i32
    %519 = arith.addi %485, %c11_i32_87 : i32
    %520 = arith.index_cast %519 : i32 to index
    %521 = memref.load %arg1[%520] : memref<288xf32, #tpu.memory_space<smem>>
    %c12_i32_88 = arith.constant 12 : i32
    %522 = arith.addi %485, %c12_i32_88 : i32
    %523 = arith.index_cast %522 : i32 to index
    %524 = memref.load %arg1[%523] : memref<288xf32, #tpu.memory_space<smem>>
    %c13_i32_89 = arith.constant 13 : i32
    %525 = arith.addi %485, %c13_i32_89 : i32
    %526 = arith.index_cast %525 : i32 to index
    %527 = memref.load %arg1[%526] : memref<288xf32, #tpu.memory_space<smem>>
    %c14_i32_90 = arith.constant 14 : i32
    %528 = arith.addi %485, %c14_i32_90 : i32
    %529 = arith.index_cast %528 : i32 to index
    %530 = memref.load %arg1[%529] : memref<288xf32, #tpu.memory_space<smem>>
    %c15_i32_91 = arith.constant 15 : i32
    %531 = arith.addi %485, %c15_i32_91 : i32
    %532 = arith.index_cast %531 : i32 to index
    %533 = memref.load %arg1[%532] : memref<288xf32, #tpu.memory_space<smem>>
    %c16_i32_92 = arith.constant 16 : i32
    %534 = arith.addi %485, %c16_i32_92 : i32
    %535 = arith.index_cast %534 : i32 to index
    %536 = memref.load %arg1[%535] : memref<288xf32, #tpu.memory_space<smem>>
    %c17_i32_93 = arith.constant 17 : i32
    %537 = arith.addi %485, %c17_i32_93 : i32
    %538 = arith.index_cast %537 : i32 to index
    %539 = memref.load %arg1[%538] : memref<288xf32, #tpu.memory_space<smem>>
    %540 = arith.subf %497, %488 : f32
    %541 = arith.subf %509, %491 : f32
    %542 = arith.mulf %540, %541 : f32
    %543 = arith.subf %500, %491 : f32
    %544 = arith.subf %506, %488 : f32
    %545 = arith.mulf %543, %544 : f32
    %546 = arith.subf %542, %545 : f32
    %547 = math.absf %546 : f32
    %cst_94 = arith.constant 9.99999993E-9 : f32
    %548 = arith.cmpf ogt, %547, %cst_94 : f32
    %cst_95 = arith.constant 1.000000e+00 : f32
    %549 = arith.select %548, %546, %cst_95 : f32
    %cst_96 = arith.constant 1.000000e+00 : f32
    %550 = arith.divf %cst_96, %549 : f32
    %cst_97 = arith.constant 0.000000e+00 : f32
    %551 = arith.select %548, %550, %cst_97 : f32
    %552 = arith.subf %500, %509 : f32
    %553 = arith.mulf %552, %551 : f32
    %554 = arith.subf %506, %497 : f32
    %555 = arith.mulf %554, %551 : f32
    %556 = arith.mulf %497, %509 : f32
    %557 = arith.mulf %500, %506 : f32
    %558 = arith.subf %556, %557 : f32
    %559 = arith.mulf %558, %551 : f32
    %cst_98 = arith.constant -1.000000e+00 : f32
    %560 = arith.select %548, %559, %cst_98 : f32
    %561 = arith.subf %509, %491 : f32
    %562 = arith.mulf %561, %551 : f32
    %563 = arith.subf %488, %506 : f32
    %564 = arith.mulf %563, %551 : f32
    %565 = arith.mulf %506, %491 : f32
    %566 = arith.mulf %509, %488 : f32
    %567 = arith.subf %565, %566 : f32
    %568 = arith.mulf %567, %551 : f32
    %569 = arith.subf %494, %512 : f32
    %570 = arith.subf %503, %512 : f32
    %571 = arith.subf %515, %533 : f32
    %572 = arith.subf %524, %533 : f32
    %573 = arith.subf %518, %536 : f32
    %574 = arith.subf %527, %536 : f32
    %575 = arith.subf %521, %539 : f32
    %576 = arith.subf %530, %539 : f32
    %577 = vector.broadcast %553 : f32 to vector<2x128xf32>
    %578 = arith.mulf %577, %17 : vector<2x128xf32>
    %579 = vector.broadcast %555 : f32 to vector<2x128xf32>
    %580 = arith.mulf %579, %23 : vector<2x128xf32>
    %581 = arith.addf %578, %580 : vector<2x128xf32>
    %582 = vector.broadcast %560 : f32 to vector<2x128xf32>
    %583 = arith.addf %581, %582 : vector<2x128xf32>
    %584 = vector.broadcast %562 : f32 to vector<2x128xf32>
    %585 = arith.mulf %584, %17 : vector<2x128xf32>
    %586 = vector.broadcast %564 : f32 to vector<2x128xf32>
    %587 = arith.mulf %586, %23 : vector<2x128xf32>
    %588 = arith.addf %585, %587 : vector<2x128xf32>
    %589 = vector.broadcast %568 : f32 to vector<2x128xf32>
    %590 = arith.addf %588, %589 : vector<2x128xf32>
    %cst_99 = arith.constant 1.000000e+00 : f32
    %591 = vector.broadcast %cst_99 : f32 to vector<2x128xf32>
    %592 = arith.subf %591, %583 : vector<2x128xf32>
    %593 = arith.subf %592, %590 : vector<2x128xf32>
    %594 = arith.minimumf %583, %590 : vector<2x128xf32>
    %595 = arith.minimumf %594, %593 : vector<2x128xf32>
    %cst_100 = arith.constant 0.000000e+00 : f32
    %596 = vector.broadcast %cst_100 : f32 to vector<2x128xf32>
    %597 = arith.cmpf oge, %595, %596 : vector<2x128xf32>
    %598 = vector.broadcast %569 : f32 to vector<2x128xf32>
    %599 = arith.mulf %583, %598 : vector<2x128xf32>
    %600 = vector.broadcast %570 : f32 to vector<2x128xf32>
    %601 = arith.mulf %590, %600 : vector<2x128xf32>
    %602 = arith.addf %599, %601 : vector<2x128xf32>
    %603 = vector.broadcast %512 : f32 to vector<2x128xf32>
    %604 = arith.addf %602, %603 : vector<2x128xf32>
    %605 = arith.cmpf olt, %604, %458 : vector<2x128xf32>
    %606 = arith.andi %597, %605 : vector<2x128xi1>
    %cst_101 = arith.constant 0.000000e+00 : f32
    %607 = vector.broadcast %cst_101 : f32 to vector<2x128xf32>
    %608 = arith.cmpf ogt, %604, %607 : vector<2x128xf32>
    %609 = arith.andi %606, %608 : vector<2x128xi1>
    %610 = arith.select %609, %604, %458 : vector<2x128xi1>, vector<2x128xf32>
    %611 = vector.broadcast %571 : f32 to vector<2x128xf32>
    %612 = arith.mulf %583, %611 : vector<2x128xf32>
    %613 = vector.broadcast %572 : f32 to vector<2x128xf32>
    %614 = arith.mulf %590, %613 : vector<2x128xf32>
    %615 = arith.addf %612, %614 : vector<2x128xf32>
    %616 = vector.broadcast %533 : f32 to vector<2x128xf32>
    %617 = arith.addf %615, %616 : vector<2x128xf32>
    %618 = arith.select %609, %617, %466 : vector<2x128xi1>, vector<2x128xf32>
    %619 = vector.broadcast %573 : f32 to vector<2x128xf32>
    %620 = arith.mulf %583, %619 : vector<2x128xf32>
    %621 = vector.broadcast %574 : f32 to vector<2x128xf32>
    %622 = arith.mulf %590, %621 : vector<2x128xf32>
    %623 = arith.addf %620, %622 : vector<2x128xf32>
    %624 = vector.broadcast %536 : f32 to vector<2x128xf32>
    %625 = arith.addf %623, %624 : vector<2x128xf32>
    %626 = arith.select %609, %625, %474 : vector<2x128xi1>, vector<2x128xf32>
    %627 = vector.broadcast %575 : f32 to vector<2x128xf32>
    %628 = arith.mulf %583, %627 : vector<2x128xf32>
    %629 = vector.broadcast %576 : f32 to vector<2x128xf32>
    %630 = arith.mulf %590, %629 : vector<2x128xf32>
    %631 = arith.addf %628, %630 : vector<2x128xf32>
    %632 = vector.broadcast %539 : f32 to vector<2x128xf32>
    %633 = arith.addf %631, %632 : vector<2x128xf32>
    %634 = arith.select %609, %633, %482 : vector<2x128xi1>, vector<2x128xf32>
    %cst_102 = arith.constant 1.000000e+00 : f32
    %635 = vector.broadcast %cst_102 : f32 to vector<2x128xf32>
    %636 = arith.select %609, %635, %484 : vector<2x128xi1>, vector<2x128xf32>
    %c72_i32 = arith.constant 72 : i32
    %637 = arith.addi %0, %c72_i32 : i32
    %c0_i32_103 = arith.constant 0 : i32
    %638 = arith.addi %637, %c0_i32_103 : i32
    %639 = arith.index_cast %638 : i32 to index
    %640 = memref.load %arg1[%639] : memref<288xf32, #tpu.memory_space<smem>>
    %c1_i32_104 = arith.constant 1 : i32
    %641 = arith.addi %637, %c1_i32_104 : i32
    %642 = arith.index_cast %641 : i32 to index
    %643 = memref.load %arg1[%642] : memref<288xf32, #tpu.memory_space<smem>>
    %c2_i32_105 = arith.constant 2 : i32
    %644 = arith.addi %637, %c2_i32_105 : i32
    %645 = arith.index_cast %644 : i32 to index
    %646 = memref.load %arg1[%645] : memref<288xf32, #tpu.memory_space<smem>>
    %c3_i32_106 = arith.constant 3 : i32
    %647 = arith.addi %637, %c3_i32_106 : i32
    %648 = arith.index_cast %647 : i32 to index
    %649 = memref.load %arg1[%648] : memref<288xf32, #tpu.memory_space<smem>>
    %c4_i32_107 = arith.constant 4 : i32
    %650 = arith.addi %637, %c4_i32_107 : i32
    %651 = arith.index_cast %650 : i32 to index
    %652 = memref.load %arg1[%651] : memref<288xf32, #tpu.memory_space<smem>>
    %c5_i32_108 = arith.constant 5 : i32
    %653 = arith.addi %637, %c5_i32_108 : i32
    %654 = arith.index_cast %653 : i32 to index
    %655 = memref.load %arg1[%654] : memref<288xf32, #tpu.memory_space<smem>>
    %c6_i32_109 = arith.constant 6 : i32
    %656 = arith.addi %637, %c6_i32_109 : i32
    %657 = arith.index_cast %656 : i32 to index
    %658 = memref.load %arg1[%657] : memref<288xf32, #tpu.memory_space<smem>>
    %c7_i32_110 = arith.constant 7 : i32
    %659 = arith.addi %637, %c7_i32_110 : i32
    %660 = arith.index_cast %659 : i32 to index
    %661 = memref.load %arg1[%660] : memref<288xf32, #tpu.memory_space<smem>>
    %c8_i32_111 = arith.constant 8 : i32
    %662 = arith.addi %637, %c8_i32_111 : i32
    %663 = arith.index_cast %662 : i32 to index
    %664 = memref.load %arg1[%663] : memref<288xf32, #tpu.memory_space<smem>>
    %c9_i32_112 = arith.constant 9 : i32
    %665 = arith.addi %637, %c9_i32_112 : i32
    %666 = arith.index_cast %665 : i32 to index
    %667 = memref.load %arg1[%666] : memref<288xf32, #tpu.memory_space<smem>>
    %c10_i32_113 = arith.constant 10 : i32
    %668 = arith.addi %637, %c10_i32_113 : i32
    %669 = arith.index_cast %668 : i32 to index
    %670 = memref.load %arg1[%669] : memref<288xf32, #tpu.memory_space<smem>>
    %c11_i32_114 = arith.constant 11 : i32
    %671 = arith.addi %637, %c11_i32_114 : i32
    %672 = arith.index_cast %671 : i32 to index
    %673 = memref.load %arg1[%672] : memref<288xf32, #tpu.memory_space<smem>>
    %c12_i32_115 = arith.constant 12 : i32
    %674 = arith.addi %637, %c12_i32_115 : i32
    %675 = arith.index_cast %674 : i32 to index
    %676 = memref.load %arg1[%675] : memref<288xf32, #tpu.memory_space<smem>>
    %c13_i32_116 = arith.constant 13 : i32
    %677 = arith.addi %637, %c13_i32_116 : i32
    %678 = arith.index_cast %677 : i32 to index
    %679 = memref.load %arg1[%678] : memref<288xf32, #tpu.memory_space<smem>>
    %c14_i32_117 = arith.constant 14 : i32
    %680 = arith.addi %637, %c14_i32_117 : i32
    %681 = arith.index_cast %680 : i32 to index
    %682 = memref.load %arg1[%681] : memref<288xf32, #tpu.memory_space<smem>>
    %c15_i32_118 = arith.constant 15 : i32
    %683 = arith.addi %637, %c15_i32_118 : i32
    %684 = arith.index_cast %683 : i32 to index
    %685 = memref.load %arg1[%684] : memref<288xf32, #tpu.memory_space<smem>>
    %c16_i32_119 = arith.constant 16 : i32
    %686 = arith.addi %637, %c16_i32_119 : i32
    %687 = arith.index_cast %686 : i32 to index
    %688 = memref.load %arg1[%687] : memref<288xf32, #tpu.memory_space<smem>>
    %c17_i32_120 = arith.constant 17 : i32
    %689 = arith.addi %637, %c17_i32_120 : i32
    %690 = arith.index_cast %689 : i32 to index
    %691 = memref.load %arg1[%690] : memref<288xf32, #tpu.memory_space<smem>>
    %692 = arith.subf %649, %640 : f32
    %693 = arith.subf %661, %643 : f32
    %694 = arith.mulf %692, %693 : f32
    %695 = arith.subf %652, %643 : f32
    %696 = arith.subf %658, %640 : f32
    %697 = arith.mulf %695, %696 : f32
    %698 = arith.subf %694, %697 : f32
    %699 = math.absf %698 : f32
    %cst_121 = arith.constant 9.99999993E-9 : f32
    %700 = arith.cmpf ogt, %699, %cst_121 : f32
    %cst_122 = arith.constant 1.000000e+00 : f32
    %701 = arith.select %700, %698, %cst_122 : f32
    %cst_123 = arith.constant 1.000000e+00 : f32
    %702 = arith.divf %cst_123, %701 : f32
    %cst_124 = arith.constant 0.000000e+00 : f32
    %703 = arith.select %700, %702, %cst_124 : f32
    %704 = arith.subf %652, %661 : f32
    %705 = arith.mulf %704, %703 : f32
    %706 = arith.subf %658, %649 : f32
    %707 = arith.mulf %706, %703 : f32
    %708 = arith.mulf %649, %661 : f32
    %709 = arith.mulf %652, %658 : f32
    %710 = arith.subf %708, %709 : f32
    %711 = arith.mulf %710, %703 : f32
    %cst_125 = arith.constant -1.000000e+00 : f32
    %712 = arith.select %700, %711, %cst_125 : f32
    %713 = arith.subf %661, %643 : f32
    %714 = arith.mulf %713, %703 : f32
    %715 = arith.subf %640, %658 : f32
    %716 = arith.mulf %715, %703 : f32
    %717 = arith.mulf %658, %643 : f32
    %718 = arith.mulf %661, %640 : f32
    %719 = arith.subf %717, %718 : f32
    %720 = arith.mulf %719, %703 : f32
    %721 = arith.subf %646, %664 : f32
    %722 = arith.subf %655, %664 : f32
    %723 = arith.subf %667, %685 : f32
    %724 = arith.subf %676, %685 : f32
    %725 = arith.subf %670, %688 : f32
    %726 = arith.subf %679, %688 : f32
    %727 = arith.subf %673, %691 : f32
    %728 = arith.subf %682, %691 : f32
    %729 = vector.broadcast %705 : f32 to vector<2x128xf32>
    %730 = arith.mulf %729, %17 : vector<2x128xf32>
    %731 = vector.broadcast %707 : f32 to vector<2x128xf32>
    %732 = arith.mulf %731, %23 : vector<2x128xf32>
    %733 = arith.addf %730, %732 : vector<2x128xf32>
    %734 = vector.broadcast %712 : f32 to vector<2x128xf32>
    %735 = arith.addf %733, %734 : vector<2x128xf32>
    %736 = vector.broadcast %714 : f32 to vector<2x128xf32>
    %737 = arith.mulf %736, %17 : vector<2x128xf32>
    %738 = vector.broadcast %716 : f32 to vector<2x128xf32>
    %739 = arith.mulf %738, %23 : vector<2x128xf32>
    %740 = arith.addf %737, %739 : vector<2x128xf32>
    %741 = vector.broadcast %720 : f32 to vector<2x128xf32>
    %742 = arith.addf %740, %741 : vector<2x128xf32>
    %cst_126 = arith.constant 1.000000e+00 : f32
    %743 = vector.broadcast %cst_126 : f32 to vector<2x128xf32>
    %744 = arith.subf %743, %735 : vector<2x128xf32>
    %745 = arith.subf %744, %742 : vector<2x128xf32>
    %746 = arith.minimumf %735, %742 : vector<2x128xf32>
    %747 = arith.minimumf %746, %745 : vector<2x128xf32>
    %cst_127 = arith.constant 0.000000e+00 : f32
    %748 = vector.broadcast %cst_127 : f32 to vector<2x128xf32>
    %749 = arith.cmpf oge, %747, %748 : vector<2x128xf32>
    %750 = vector.broadcast %721 : f32 to vector<2x128xf32>
    %751 = arith.mulf %735, %750 : vector<2x128xf32>
    %752 = vector.broadcast %722 : f32 to vector<2x128xf32>
    %753 = arith.mulf %742, %752 : vector<2x128xf32>
    %754 = arith.addf %751, %753 : vector<2x128xf32>
    %755 = vector.broadcast %664 : f32 to vector<2x128xf32>
    %756 = arith.addf %754, %755 : vector<2x128xf32>
    %757 = arith.cmpf olt, %756, %610 : vector<2x128xf32>
    %758 = arith.andi %749, %757 : vector<2x128xi1>
    %cst_128 = arith.constant 0.000000e+00 : f32
    %759 = vector.broadcast %cst_128 : f32 to vector<2x128xf32>
    %760 = arith.cmpf ogt, %756, %759 : vector<2x128xf32>
    %761 = arith.andi %758, %760 : vector<2x128xi1>
    %762 = arith.select %761, %756, %610 : vector<2x128xi1>, vector<2x128xf32>
    %763 = vector.broadcast %723 : f32 to vector<2x128xf32>
    %764 = arith.mulf %735, %763 : vector<2x128xf32>
    %765 = vector.broadcast %724 : f32 to vector<2x128xf32>
    %766 = arith.mulf %742, %765 : vector<2x128xf32>
    %767 = arith.addf %764, %766 : vector<2x128xf32>
    %768 = vector.broadcast %685 : f32 to vector<2x128xf32>
    %769 = arith.addf %767, %768 : vector<2x128xf32>
    %770 = arith.select %761, %769, %618 : vector<2x128xi1>, vector<2x128xf32>
    %771 = vector.broadcast %725 : f32 to vector<2x128xf32>
    %772 = arith.mulf %735, %771 : vector<2x128xf32>
    %773 = vector.broadcast %726 : f32 to vector<2x128xf32>
    %774 = arith.mulf %742, %773 : vector<2x128xf32>
    %775 = arith.addf %772, %774 : vector<2x128xf32>
    %776 = vector.broadcast %688 : f32 to vector<2x128xf32>
    %777 = arith.addf %775, %776 : vector<2x128xf32>
    %778 = arith.select %761, %777, %626 : vector<2x128xi1>, vector<2x128xf32>
    %779 = vector.broadcast %727 : f32 to vector<2x128xf32>
    %780 = arith.mulf %735, %779 : vector<2x128xf32>
    %781 = vector.broadcast %728 : f32 to vector<2x128xf32>
    %782 = arith.mulf %742, %781 : vector<2x128xf32>
    %783 = arith.addf %780, %782 : vector<2x128xf32>
    %784 = vector.broadcast %691 : f32 to vector<2x128xf32>
    %785 = arith.addf %783, %784 : vector<2x128xf32>
    %786 = arith.select %761, %785, %634 : vector<2x128xi1>, vector<2x128xf32>
    %cst_129 = arith.constant 1.000000e+00 : f32
    %787 = vector.broadcast %cst_129 : f32 to vector<2x128xf32>
    %788 = arith.select %761, %787, %636 : vector<2x128xi1>, vector<2x128xf32>
    %c90_i32 = arith.constant 90 : i32
    %789 = arith.addi %0, %c90_i32 : i32
    %c0_i32_130 = arith.constant 0 : i32
    %790 = arith.addi %789, %c0_i32_130 : i32
    %791 = arith.index_cast %790 : i32 to index
    %792 = memref.load %arg1[%791] : memref<288xf32, #tpu.memory_space<smem>>
    %c1_i32_131 = arith.constant 1 : i32
    %793 = arith.addi %789, %c1_i32_131 : i32
    %794 = arith.index_cast %793 : i32 to index
    %795 = memref.load %arg1[%794] : memref<288xf32, #tpu.memory_space<smem>>
    %c2_i32_132 = arith.constant 2 : i32
    %796 = arith.addi %789, %c2_i32_132 : i32
    %797 = arith.index_cast %796 : i32 to index
    %798 = memref.load %arg1[%797] : memref<288xf32, #tpu.memory_space<smem>>
    %c3_i32_133 = arith.constant 3 : i32
    %799 = arith.addi %789, %c3_i32_133 : i32
    %800 = arith.index_cast %799 : i32 to index
    %801 = memref.load %arg1[%800] : memref<288xf32, #tpu.memory_space<smem>>
    %c4_i32_134 = arith.constant 4 : i32
    %802 = arith.addi %789, %c4_i32_134 : i32
    %803 = arith.index_cast %802 : i32 to index
    %804 = memref.load %arg1[%803] : memref<288xf32, #tpu.memory_space<smem>>
    %c5_i32_135 = arith.constant 5 : i32
    %805 = arith.addi %789, %c5_i32_135 : i32
    %806 = arith.index_cast %805 : i32 to index
    %807 = memref.load %arg1[%806] : memref<288xf32, #tpu.memory_space<smem>>
    %c6_i32_136 = arith.constant 6 : i32
    %808 = arith.addi %789, %c6_i32_136 : i32
    %809 = arith.index_cast %808 : i32 to index
    %810 = memref.load %arg1[%809] : memref<288xf32, #tpu.memory_space<smem>>
    %c7_i32_137 = arith.constant 7 : i32
    %811 = arith.addi %789, %c7_i32_137 : i32
    %812 = arith.index_cast %811 : i32 to index
    %813 = memref.load %arg1[%812] : memref<288xf32, #tpu.memory_space<smem>>
    %c8_i32_138 = arith.constant 8 : i32
    %814 = arith.addi %789, %c8_i32_138 : i32
    %815 = arith.index_cast %814 : i32 to index
    %816 = memref.load %arg1[%815] : memref<288xf32, #tpu.memory_space<smem>>
    %c9_i32_139 = arith.constant 9 : i32
    %817 = arith.addi %789, %c9_i32_139 : i32
    %818 = arith.index_cast %817 : i32 to index
    %819 = memref.load %arg1[%818] : memref<288xf32, #tpu.memory_space<smem>>
    %c10_i32_140 = arith.constant 10 : i32
    %820 = arith.addi %789, %c10_i32_140 : i32
    %821 = arith.index_cast %820 : i32 to index
    %822 = memref.load %arg1[%821] : memref<288xf32, #tpu.memory_space<smem>>
    %c11_i32_141 = arith.constant 11 : i32
    %823 = arith.addi %789, %c11_i32_141 : i32
    %824 = arith.index_cast %823 : i32 to index
    %825 = memref.load %arg1[%824] : memref<288xf32, #tpu.memory_space<smem>>
    %c12_i32_142 = arith.constant 12 : i32
    %826 = arith.addi %789, %c12_i32_142 : i32
    %827 = arith.index_cast %826 : i32 to index
    %828 = memref.load %arg1[%827] : memref<288xf32, #tpu.memory_space<smem>>
    %c13_i32_143 = arith.constant 13 : i32
    %829 = arith.addi %789, %c13_i32_143 : i32
    %830 = arith.index_cast %829 : i32 to index
    %831 = memref.load %arg1[%830] : memref<288xf32, #tpu.memory_space<smem>>
    %c14_i32_144 = arith.constant 14 : i32
    %832 = arith.addi %789, %c14_i32_144 : i32
    %833 = arith.index_cast %832 : i32 to index
    %834 = memref.load %arg1[%833] : memref<288xf32, #tpu.memory_space<smem>>
    %c15_i32_145 = arith.constant 15 : i32
    %835 = arith.addi %789, %c15_i32_145 : i32
    %836 = arith.index_cast %835 : i32 to index
    %837 = memref.load %arg1[%836] : memref<288xf32, #tpu.memory_space<smem>>
    %c16_i32_146 = arith.constant 16 : i32
    %838 = arith.addi %789, %c16_i32_146 : i32
    %839 = arith.index_cast %838 : i32 to index
    %840 = memref.load %arg1[%839] : memref<288xf32, #tpu.memory_space<smem>>
    %c17_i32_147 = arith.constant 17 : i32
    %841 = arith.addi %789, %c17_i32_147 : i32
    %842 = arith.index_cast %841 : i32 to index
    %843 = memref.load %arg1[%842] : memref<288xf32, #tpu.memory_space<smem>>
    %844 = arith.subf %801, %792 : f32
    %845 = arith.subf %813, %795 : f32
    %846 = arith.mulf %844, %845 : f32
    %847 = arith.subf %804, %795 : f32
    %848 = arith.subf %810, %792 : f32
    %849 = arith.mulf %847, %848 : f32
    %850 = arith.subf %846, %849 : f32
    %851 = math.absf %850 : f32
    %cst_148 = arith.constant 9.99999993E-9 : f32
    %852 = arith.cmpf ogt, %851, %cst_148 : f32
    %cst_149 = arith.constant 1.000000e+00 : f32
    %853 = arith.select %852, %850, %cst_149 : f32
    %cst_150 = arith.constant 1.000000e+00 : f32
    %854 = arith.divf %cst_150, %853 : f32
    %cst_151 = arith.constant 0.000000e+00 : f32
    %855 = arith.select %852, %854, %cst_151 : f32
    %856 = arith.subf %804, %813 : f32
    %857 = arith.mulf %856, %855 : f32
    %858 = arith.subf %810, %801 : f32
    %859 = arith.mulf %858, %855 : f32
    %860 = arith.mulf %801, %813 : f32
    %861 = arith.mulf %804, %810 : f32
    %862 = arith.subf %860, %861 : f32
    %863 = arith.mulf %862, %855 : f32
    %cst_152 = arith.constant -1.000000e+00 : f32
    %864 = arith.select %852, %863, %cst_152 : f32
    %865 = arith.subf %813, %795 : f32
    %866 = arith.mulf %865, %855 : f32
    %867 = arith.subf %792, %810 : f32
    %868 = arith.mulf %867, %855 : f32
    %869 = arith.mulf %810, %795 : f32
    %870 = arith.mulf %813, %792 : f32
    %871 = arith.subf %869, %870 : f32
    %872 = arith.mulf %871, %855 : f32
    %873 = arith.subf %798, %816 : f32
    %874 = arith.subf %807, %816 : f32
    %875 = arith.subf %819, %837 : f32
    %876 = arith.subf %828, %837 : f32
    %877 = arith.subf %822, %840 : f32
    %878 = arith.subf %831, %840 : f32
    %879 = arith.subf %825, %843 : f32
    %880 = arith.subf %834, %843 : f32
    %881 = vector.broadcast %857 : f32 to vector<2x128xf32>
    %882 = arith.mulf %881, %17 : vector<2x128xf32>
    %883 = vector.broadcast %859 : f32 to vector<2x128xf32>
    %884 = arith.mulf %883, %23 : vector<2x128xf32>
    %885 = arith.addf %882, %884 : vector<2x128xf32>
    %886 = vector.broadcast %864 : f32 to vector<2x128xf32>
    %887 = arith.addf %885, %886 : vector<2x128xf32>
    %888 = vector.broadcast %866 : f32 to vector<2x128xf32>
    %889 = arith.mulf %888, %17 : vector<2x128xf32>
    %890 = vector.broadcast %868 : f32 to vector<2x128xf32>
    %891 = arith.mulf %890, %23 : vector<2x128xf32>
    %892 = arith.addf %889, %891 : vector<2x128xf32>
    %893 = vector.broadcast %872 : f32 to vector<2x128xf32>
    %894 = arith.addf %892, %893 : vector<2x128xf32>
    %cst_153 = arith.constant 1.000000e+00 : f32
    %895 = vector.broadcast %cst_153 : f32 to vector<2x128xf32>
    %896 = arith.subf %895, %887 : vector<2x128xf32>
    %897 = arith.subf %896, %894 : vector<2x128xf32>
    %898 = arith.minimumf %887, %894 : vector<2x128xf32>
    %899 = arith.minimumf %898, %897 : vector<2x128xf32>
    %cst_154 = arith.constant 0.000000e+00 : f32
    %900 = vector.broadcast %cst_154 : f32 to vector<2x128xf32>
    %901 = arith.cmpf oge, %899, %900 : vector<2x128xf32>
    %902 = vector.broadcast %873 : f32 to vector<2x128xf32>
    %903 = arith.mulf %887, %902 : vector<2x128xf32>
    %904 = vector.broadcast %874 : f32 to vector<2x128xf32>
    %905 = arith.mulf %894, %904 : vector<2x128xf32>
    %906 = arith.addf %903, %905 : vector<2x128xf32>
    %907 = vector.broadcast %816 : f32 to vector<2x128xf32>
    %908 = arith.addf %906, %907 : vector<2x128xf32>
    %909 = arith.cmpf olt, %908, %762 : vector<2x128xf32>
    %910 = arith.andi %901, %909 : vector<2x128xi1>
    %cst_155 = arith.constant 0.000000e+00 : f32
    %911 = vector.broadcast %cst_155 : f32 to vector<2x128xf32>
    %912 = arith.cmpf ogt, %908, %911 : vector<2x128xf32>
    %913 = arith.andi %910, %912 : vector<2x128xi1>
    %914 = arith.select %913, %908, %762 : vector<2x128xi1>, vector<2x128xf32>
    %915 = vector.broadcast %875 : f32 to vector<2x128xf32>
    %916 = arith.mulf %887, %915 : vector<2x128xf32>
    %917 = vector.broadcast %876 : f32 to vector<2x128xf32>
    %918 = arith.mulf %894, %917 : vector<2x128xf32>
    %919 = arith.addf %916, %918 : vector<2x128xf32>
    %920 = vector.broadcast %837 : f32 to vector<2x128xf32>
    %921 = arith.addf %919, %920 : vector<2x128xf32>
    %922 = arith.select %913, %921, %770 : vector<2x128xi1>, vector<2x128xf32>
    %923 = vector.broadcast %877 : f32 to vector<2x128xf32>
    %924 = arith.mulf %887, %923 : vector<2x128xf32>
    %925 = vector.broadcast %878 : f32 to vector<2x128xf32>
    %926 = arith.mulf %894, %925 : vector<2x128xf32>
    %927 = arith.addf %924, %926 : vector<2x128xf32>
    %928 = vector.broadcast %840 : f32 to vector<2x128xf32>
    %929 = arith.addf %927, %928 : vector<2x128xf32>
    %930 = arith.select %913, %929, %778 : vector<2x128xi1>, vector<2x128xf32>
    %931 = vector.broadcast %879 : f32 to vector<2x128xf32>
    %932 = arith.mulf %887, %931 : vector<2x128xf32>
    %933 = vector.broadcast %880 : f32 to vector<2x128xf32>
    %934 = arith.mulf %894, %933 : vector<2x128xf32>
    %935 = arith.addf %932, %934 : vector<2x128xf32>
    %936 = vector.broadcast %843 : f32 to vector<2x128xf32>
    %937 = arith.addf %935, %936 : vector<2x128xf32>
    %938 = arith.select %913, %937, %786 : vector<2x128xi1>, vector<2x128xf32>
    %cst_156 = arith.constant 1.000000e+00 : f32
    %939 = vector.broadcast %cst_156 : f32 to vector<2x128xf32>
    %940 = arith.select %913, %939, %788 : vector<2x128xi1>, vector<2x128xf32>
    %c108_i32 = arith.constant 108 : i32
    %941 = arith.addi %0, %c108_i32 : i32
    %c0_i32_157 = arith.constant 0 : i32
    %942 = arith.addi %941, %c0_i32_157 : i32
    %943 = arith.index_cast %942 : i32 to index
    %944 = memref.load %arg1[%943] : memref<288xf32, #tpu.memory_space<smem>>
    %c1_i32_158 = arith.constant 1 : i32
    %945 = arith.addi %941, %c1_i32_158 : i32
    %946 = arith.index_cast %945 : i32 to index
    %947 = memref.load %arg1[%946] : memref<288xf32, #tpu.memory_space<smem>>
    %c2_i32_159 = arith.constant 2 : i32
    %948 = arith.addi %941, %c2_i32_159 : i32
    %949 = arith.index_cast %948 : i32 to index
    %950 = memref.load %arg1[%949] : memref<288xf32, #tpu.memory_space<smem>>
    %c3_i32_160 = arith.constant 3 : i32
    %951 = arith.addi %941, %c3_i32_160 : i32
    %952 = arith.index_cast %951 : i32 to index
    %953 = memref.load %arg1[%952] : memref<288xf32, #tpu.memory_space<smem>>
    %c4_i32_161 = arith.constant 4 : i32
    %954 = arith.addi %941, %c4_i32_161 : i32
    %955 = arith.index_cast %954 : i32 to index
    %956 = memref.load %arg1[%955] : memref<288xf32, #tpu.memory_space<smem>>
    %c5_i32_162 = arith.constant 5 : i32
    %957 = arith.addi %941, %c5_i32_162 : i32
    %958 = arith.index_cast %957 : i32 to index
    %959 = memref.load %arg1[%958] : memref<288xf32, #tpu.memory_space<smem>>
    %c6_i32_163 = arith.constant 6 : i32
    %960 = arith.addi %941, %c6_i32_163 : i32
    %961 = arith.index_cast %960 : i32 to index
    %962 = memref.load %arg1[%961] : memref<288xf32, #tpu.memory_space<smem>>
    %c7_i32_164 = arith.constant 7 : i32
    %963 = arith.addi %941, %c7_i32_164 : i32
    %964 = arith.index_cast %963 : i32 to index
    %965 = memref.load %arg1[%964] : memref<288xf32, #tpu.memory_space<smem>>
    %c8_i32_165 = arith.constant 8 : i32
    %966 = arith.addi %941, %c8_i32_165 : i32
    %967 = arith.index_cast %966 : i32 to index
    %968 = memref.load %arg1[%967] : memref<288xf32, #tpu.memory_space<smem>>
    %c9_i32_166 = arith.constant 9 : i32
    %969 = arith.addi %941, %c9_i32_166 : i32
    %970 = arith.index_cast %969 : i32 to index
    %971 = memref.load %arg1[%970] : memref<288xf32, #tpu.memory_space<smem>>
    %c10_i32_167 = arith.constant 10 : i32
    %972 = arith.addi %941, %c10_i32_167 : i32
    %973 = arith.index_cast %972 : i32 to index
    %974 = memref.load %arg1[%973] : memref<288xf32, #tpu.memory_space<smem>>
    %c11_i32_168 = arith.constant 11 : i32
    %975 = arith.addi %941, %c11_i32_168 : i32
    %976 = arith.index_cast %975 : i32 to index
    %977 = memref.load %arg1[%976] : memref<288xf32, #tpu.memory_space<smem>>
    %c12_i32_169 = arith.constant 12 : i32
    %978 = arith.addi %941, %c12_i32_169 : i32
    %979 = arith.index_cast %978 : i32 to index
    %980 = memref.load %arg1[%979] : memref<288xf32, #tpu.memory_space<smem>>
    %c13_i32_170 = arith.constant 13 : i32
    %981 = arith.addi %941, %c13_i32_170 : i32
    %982 = arith.index_cast %981 : i32 to index
    %983 = memref.load %arg1[%982] : memref<288xf32, #tpu.memory_space<smem>>
    %c14_i32_171 = arith.constant 14 : i32
    %984 = arith.addi %941, %c14_i32_171 : i32
    %985 = arith.index_cast %984 : i32 to index
    %986 = memref.load %arg1[%985] : memref<288xf32, #tpu.memory_space<smem>>
    %c15_i32_172 = arith.constant 15 : i32
    %987 = arith.addi %941, %c15_i32_172 : i32
    %988 = arith.index_cast %987 : i32 to index
    %989 = memref.load %arg1[%988] : memref<288xf32, #tpu.memory_space<smem>>
    %c16_i32_173 = arith.constant 16 : i32
    %990 = arith.addi %941, %c16_i32_173 : i32
    %991 = arith.index_cast %990 : i32 to index
    %992 = memref.load %arg1[%991] : memref<288xf32, #tpu.memory_space<smem>>
    %c17_i32_174 = arith.constant 17 : i32
    %993 = arith.addi %941, %c17_i32_174 : i32
    %994 = arith.index_cast %993 : i32 to index
    %995 = memref.load %arg1[%994] : memref<288xf32, #tpu.memory_space<smem>>
    %996 = arith.subf %953, %944 : f32
    %997 = arith.subf %965, %947 : f32
    %998 = arith.mulf %996, %997 : f32
    %999 = arith.subf %956, %947 : f32
    %1000 = arith.subf %962, %944 : f32
    %1001 = arith.mulf %999, %1000 : f32
    %1002 = arith.subf %998, %1001 : f32
    %1003 = math.absf %1002 : f32
    %cst_175 = arith.constant 9.99999993E-9 : f32
    %1004 = arith.cmpf ogt, %1003, %cst_175 : f32
    %cst_176 = arith.constant 1.000000e+00 : f32
    %1005 = arith.select %1004, %1002, %cst_176 : f32
    %cst_177 = arith.constant 1.000000e+00 : f32
    %1006 = arith.divf %cst_177, %1005 : f32
    %cst_178 = arith.constant 0.000000e+00 : f32
    %1007 = arith.select %1004, %1006, %cst_178 : f32
    %1008 = arith.subf %956, %965 : f32
    %1009 = arith.mulf %1008, %1007 : f32
    %1010 = arith.subf %962, %953 : f32
    %1011 = arith.mulf %1010, %1007 : f32
    %1012 = arith.mulf %953, %965 : f32
    %1013 = arith.mulf %956, %962 : f32
    %1014 = arith.subf %1012, %1013 : f32
    %1015 = arith.mulf %1014, %1007 : f32
    %cst_179 = arith.constant -1.000000e+00 : f32
    %1016 = arith.select %1004, %1015, %cst_179 : f32
    %1017 = arith.subf %965, %947 : f32
    %1018 = arith.mulf %1017, %1007 : f32
    %1019 = arith.subf %944, %962 : f32
    %1020 = arith.mulf %1019, %1007 : f32
    %1021 = arith.mulf %962, %947 : f32
    %1022 = arith.mulf %965, %944 : f32
    %1023 = arith.subf %1021, %1022 : f32
    %1024 = arith.mulf %1023, %1007 : f32
    %1025 = arith.subf %950, %968 : f32
    %1026 = arith.subf %959, %968 : f32
    %1027 = arith.subf %971, %989 : f32
    %1028 = arith.subf %980, %989 : f32
    %1029 = arith.subf %974, %992 : f32
    %1030 = arith.subf %983, %992 : f32
    %1031 = arith.subf %977, %995 : f32
    %1032 = arith.subf %986, %995 : f32
    %1033 = vector.broadcast %1009 : f32 to vector<2x128xf32>
    %1034 = arith.mulf %1033, %17 : vector<2x128xf32>
    %1035 = vector.broadcast %1011 : f32 to vector<2x128xf32>
    %1036 = arith.mulf %1035, %23 : vector<2x128xf32>
    %1037 = arith.addf %1034, %1036 : vector<2x128xf32>
    %1038 = vector.broadcast %1016 : f32 to vector<2x128xf32>
    %1039 = arith.addf %1037, %1038 : vector<2x128xf32>
    %1040 = vector.broadcast %1018 : f32 to vector<2x128xf32>
    %1041 = arith.mulf %1040, %17 : vector<2x128xf32>
    %1042 = vector.broadcast %1020 : f32 to vector<2x128xf32>
    %1043 = arith.mulf %1042, %23 : vector<2x128xf32>
    %1044 = arith.addf %1041, %1043 : vector<2x128xf32>
    %1045 = vector.broadcast %1024 : f32 to vector<2x128xf32>
    %1046 = arith.addf %1044, %1045 : vector<2x128xf32>
    %cst_180 = arith.constant 1.000000e+00 : f32
    %1047 = vector.broadcast %cst_180 : f32 to vector<2x128xf32>
    %1048 = arith.subf %1047, %1039 : vector<2x128xf32>
    %1049 = arith.subf %1048, %1046 : vector<2x128xf32>
    %1050 = arith.minimumf %1039, %1046 : vector<2x128xf32>
    %1051 = arith.minimumf %1050, %1049 : vector<2x128xf32>
    %cst_181 = arith.constant 0.000000e+00 : f32
    %1052 = vector.broadcast %cst_181 : f32 to vector<2x128xf32>
    %1053 = arith.cmpf oge, %1051, %1052 : vector<2x128xf32>
    %1054 = vector.broadcast %1025 : f32 to vector<2x128xf32>
    %1055 = arith.mulf %1039, %1054 : vector<2x128xf32>
    %1056 = vector.broadcast %1026 : f32 to vector<2x128xf32>
    %1057 = arith.mulf %1046, %1056 : vector<2x128xf32>
    %1058 = arith.addf %1055, %1057 : vector<2x128xf32>
    %1059 = vector.broadcast %968 : f32 to vector<2x128xf32>
    %1060 = arith.addf %1058, %1059 : vector<2x128xf32>
    %1061 = arith.cmpf olt, %1060, %914 : vector<2x128xf32>
    %1062 = arith.andi %1053, %1061 : vector<2x128xi1>
    %cst_182 = arith.constant 0.000000e+00 : f32
    %1063 = vector.broadcast %cst_182 : f32 to vector<2x128xf32>
    %1064 = arith.cmpf ogt, %1060, %1063 : vector<2x128xf32>
    %1065 = arith.andi %1062, %1064 : vector<2x128xi1>
    %1066 = arith.select %1065, %1060, %914 : vector<2x128xi1>, vector<2x128xf32>
    %1067 = vector.broadcast %1027 : f32 to vector<2x128xf32>
    %1068 = arith.mulf %1039, %1067 : vector<2x128xf32>
    %1069 = vector.broadcast %1028 : f32 to vector<2x128xf32>
    %1070 = arith.mulf %1046, %1069 : vector<2x128xf32>
    %1071 = arith.addf %1068, %1070 : vector<2x128xf32>
    %1072 = vector.broadcast %989 : f32 to vector<2x128xf32>
    %1073 = arith.addf %1071, %1072 : vector<2x128xf32>
    %1074 = arith.select %1065, %1073, %922 : vector<2x128xi1>, vector<2x128xf32>
    %1075 = vector.broadcast %1029 : f32 to vector<2x128xf32>
    %1076 = arith.mulf %1039, %1075 : vector<2x128xf32>
    %1077 = vector.broadcast %1030 : f32 to vector<2x128xf32>
    %1078 = arith.mulf %1046, %1077 : vector<2x128xf32>
    %1079 = arith.addf %1076, %1078 : vector<2x128xf32>
    %1080 = vector.broadcast %992 : f32 to vector<2x128xf32>
    %1081 = arith.addf %1079, %1080 : vector<2x128xf32>
    %1082 = arith.select %1065, %1081, %930 : vector<2x128xi1>, vector<2x128xf32>
    %1083 = vector.broadcast %1031 : f32 to vector<2x128xf32>
    %1084 = arith.mulf %1039, %1083 : vector<2x128xf32>
    %1085 = vector.broadcast %1032 : f32 to vector<2x128xf32>
    %1086 = arith.mulf %1046, %1085 : vector<2x128xf32>
    %1087 = arith.addf %1084, %1086 : vector<2x128xf32>
    %1088 = vector.broadcast %995 : f32 to vector<2x128xf32>
    %1089 = arith.addf %1087, %1088 : vector<2x128xf32>
    %1090 = arith.select %1065, %1089, %938 : vector<2x128xi1>, vector<2x128xf32>
    %cst_183 = arith.constant 1.000000e+00 : f32
    %1091 = vector.broadcast %cst_183 : f32 to vector<2x128xf32>
    %1092 = arith.select %1065, %1091, %940 : vector<2x128xi1>, vector<2x128xf32>
    %c126_i32 = arith.constant 126 : i32
    %1093 = arith.addi %0, %c126_i32 : i32
    %c0_i32_184 = arith.constant 0 : i32
    %1094 = arith.addi %1093, %c0_i32_184 : i32
    %1095 = arith.index_cast %1094 : i32 to index
    %1096 = memref.load %arg1[%1095] : memref<288xf32, #tpu.memory_space<smem>>
    %c1_i32_185 = arith.constant 1 : i32
    %1097 = arith.addi %1093, %c1_i32_185 : i32
    %1098 = arith.index_cast %1097 : i32 to index
    %1099 = memref.load %arg1[%1098] : memref<288xf32, #tpu.memory_space<smem>>
    %c2_i32_186 = arith.constant 2 : i32
    %1100 = arith.addi %1093, %c2_i32_186 : i32
    %1101 = arith.index_cast %1100 : i32 to index
    %1102 = memref.load %arg1[%1101] : memref<288xf32, #tpu.memory_space<smem>>
    %c3_i32_187 = arith.constant 3 : i32
    %1103 = arith.addi %1093, %c3_i32_187 : i32
    %1104 = arith.index_cast %1103 : i32 to index
    %1105 = memref.load %arg1[%1104] : memref<288xf32, #tpu.memory_space<smem>>
    %c4_i32_188 = arith.constant 4 : i32
    %1106 = arith.addi %1093, %c4_i32_188 : i32
    %1107 = arith.index_cast %1106 : i32 to index
    %1108 = memref.load %arg1[%1107] : memref<288xf32, #tpu.memory_space<smem>>
    %c5_i32_189 = arith.constant 5 : i32
    %1109 = arith.addi %1093, %c5_i32_189 : i32
    %1110 = arith.index_cast %1109 : i32 to index
    %1111 = memref.load %arg1[%1110] : memref<288xf32, #tpu.memory_space<smem>>
    %c6_i32_190 = arith.constant 6 : i32
    %1112 = arith.addi %1093, %c6_i32_190 : i32
    %1113 = arith.index_cast %1112 : i32 to index
    %1114 = memref.load %arg1[%1113] : memref<288xf32, #tpu.memory_space<smem>>
    %c7_i32_191 = arith.constant 7 : i32
    %1115 = arith.addi %1093, %c7_i32_191 : i32
    %1116 = arith.index_cast %1115 : i32 to index
    %1117 = memref.load %arg1[%1116] : memref<288xf32, #tpu.memory_space<smem>>
    %c8_i32_192 = arith.constant 8 : i32
    %1118 = arith.addi %1093, %c8_i32_192 : i32
    %1119 = arith.index_cast %1118 : i32 to index
    %1120 = memref.load %arg1[%1119] : memref<288xf32, #tpu.memory_space<smem>>
    %c9_i32_193 = arith.constant 9 : i32
    %1121 = arith.addi %1093, %c9_i32_193 : i32
    %1122 = arith.index_cast %1121 : i32 to index
    %1123 = memref.load %arg1[%1122] : memref<288xf32, #tpu.memory_space<smem>>
    %c10_i32_194 = arith.constant 10 : i32
    %1124 = arith.addi %1093, %c10_i32_194 : i32
    %1125 = arith.index_cast %1124 : i32 to index
    %1126 = memref.load %arg1[%1125] : memref<288xf32, #tpu.memory_space<smem>>
    %c11_i32_195 = arith.constant 11 : i32
    %1127 = arith.addi %1093, %c11_i32_195 : i32
    %1128 = arith.index_cast %1127 : i32 to index
    %1129 = memref.load %arg1[%1128] : memref<288xf32, #tpu.memory_space<smem>>
    %c12_i32_196 = arith.constant 12 : i32
    %1130 = arith.addi %1093, %c12_i32_196 : i32
    %1131 = arith.index_cast %1130 : i32 to index
    %1132 = memref.load %arg1[%1131] : memref<288xf32, #tpu.memory_space<smem>>
    %c13_i32_197 = arith.constant 13 : i32
    %1133 = arith.addi %1093, %c13_i32_197 : i32
    %1134 = arith.index_cast %1133 : i32 to index
    %1135 = memref.load %arg1[%1134] : memref<288xf32, #tpu.memory_space<smem>>
    %c14_i32_198 = arith.constant 14 : i32
    %1136 = arith.addi %1093, %c14_i32_198 : i32
    %1137 = arith.index_cast %1136 : i32 to index
    %1138 = memref.load %arg1[%1137] : memref<288xf32, #tpu.memory_space<smem>>
    %c15_i32_199 = arith.constant 15 : i32
    %1139 = arith.addi %1093, %c15_i32_199 : i32
    %1140 = arith.index_cast %1139 : i32 to index
    %1141 = memref.load %arg1[%1140] : memref<288xf32, #tpu.memory_space<smem>>
    %c16_i32_200 = arith.constant 16 : i32
    %1142 = arith.addi %1093, %c16_i32_200 : i32
    %1143 = arith.index_cast %1142 : i32 to index
    %1144 = memref.load %arg1[%1143] : memref<288xf32, #tpu.memory_space<smem>>
    %c17_i32_201 = arith.constant 17 : i32
    %1145 = arith.addi %1093, %c17_i32_201 : i32
    %1146 = arith.index_cast %1145 : i32 to index
    %1147 = memref.load %arg1[%1146] : memref<288xf32, #tpu.memory_space<smem>>
    %1148 = arith.subf %1105, %1096 : f32
    %1149 = arith.subf %1117, %1099 : f32
    %1150 = arith.mulf %1148, %1149 : f32
    %1151 = arith.subf %1108, %1099 : f32
    %1152 = arith.subf %1114, %1096 : f32
    %1153 = arith.mulf %1151, %1152 : f32
    %1154 = arith.subf %1150, %1153 : f32
    %1155 = math.absf %1154 : f32
    %cst_202 = arith.constant 9.99999993E-9 : f32
    %1156 = arith.cmpf ogt, %1155, %cst_202 : f32
    %cst_203 = arith.constant 1.000000e+00 : f32
    %1157 = arith.select %1156, %1154, %cst_203 : f32
    %cst_204 = arith.constant 1.000000e+00 : f32
    %1158 = arith.divf %cst_204, %1157 : f32
    %cst_205 = arith.constant 0.000000e+00 : f32
    %1159 = arith.select %1156, %1158, %cst_205 : f32
    %1160 = arith.subf %1108, %1117 : f32
    %1161 = arith.mulf %1160, %1159 : f32
    %1162 = arith.subf %1114, %1105 : f32
    %1163 = arith.mulf %1162, %1159 : f32
    %1164 = arith.mulf %1105, %1117 : f32
    %1165 = arith.mulf %1108, %1114 : f32
    %1166 = arith.subf %1164, %1165 : f32
    %1167 = arith.mulf %1166, %1159 : f32
    %cst_206 = arith.constant -1.000000e+00 : f32
    %1168 = arith.select %1156, %1167, %cst_206 : f32
    %1169 = arith.subf %1117, %1099 : f32
    %1170 = arith.mulf %1169, %1159 : f32
    %1171 = arith.subf %1096, %1114 : f32
    %1172 = arith.mulf %1171, %1159 : f32
    %1173 = arith.mulf %1114, %1099 : f32
    %1174 = arith.mulf %1117, %1096 : f32
    %1175 = arith.subf %1173, %1174 : f32
    %1176 = arith.mulf %1175, %1159 : f32
    %1177 = arith.subf %1102, %1120 : f32
    %1178 = arith.subf %1111, %1120 : f32
    %1179 = arith.subf %1123, %1141 : f32
    %1180 = arith.subf %1132, %1141 : f32
    %1181 = arith.subf %1126, %1144 : f32
    %1182 = arith.subf %1135, %1144 : f32
    %1183 = arith.subf %1129, %1147 : f32
    %1184 = arith.subf %1138, %1147 : f32
    %1185 = vector.broadcast %1161 : f32 to vector<2x128xf32>
    %1186 = arith.mulf %1185, %17 : vector<2x128xf32>
    %1187 = vector.broadcast %1163 : f32 to vector<2x128xf32>
    %1188 = arith.mulf %1187, %23 : vector<2x128xf32>
    %1189 = arith.addf %1186, %1188 : vector<2x128xf32>
    %1190 = vector.broadcast %1168 : f32 to vector<2x128xf32>
    %1191 = arith.addf %1189, %1190 : vector<2x128xf32>
    %1192 = vector.broadcast %1170 : f32 to vector<2x128xf32>
    %1193 = arith.mulf %1192, %17 : vector<2x128xf32>
    %1194 = vector.broadcast %1172 : f32 to vector<2x128xf32>
    %1195 = arith.mulf %1194, %23 : vector<2x128xf32>
    %1196 = arith.addf %1193, %1195 : vector<2x128xf32>
    %1197 = vector.broadcast %1176 : f32 to vector<2x128xf32>
    %1198 = arith.addf %1196, %1197 : vector<2x128xf32>
    %cst_207 = arith.constant 1.000000e+00 : f32
    %1199 = vector.broadcast %cst_207 : f32 to vector<2x128xf32>
    %1200 = arith.subf %1199, %1191 : vector<2x128xf32>
    %1201 = arith.subf %1200, %1198 : vector<2x128xf32>
    %1202 = arith.minimumf %1191, %1198 : vector<2x128xf32>
    %1203 = arith.minimumf %1202, %1201 : vector<2x128xf32>
    %cst_208 = arith.constant 0.000000e+00 : f32
    %1204 = vector.broadcast %cst_208 : f32 to vector<2x128xf32>
    %1205 = arith.cmpf oge, %1203, %1204 : vector<2x128xf32>
    %1206 = vector.broadcast %1177 : f32 to vector<2x128xf32>
    %1207 = arith.mulf %1191, %1206 : vector<2x128xf32>
    %1208 = vector.broadcast %1178 : f32 to vector<2x128xf32>
    %1209 = arith.mulf %1198, %1208 : vector<2x128xf32>
    %1210 = arith.addf %1207, %1209 : vector<2x128xf32>
    %1211 = vector.broadcast %1120 : f32 to vector<2x128xf32>
    %1212 = arith.addf %1210, %1211 : vector<2x128xf32>
    %1213 = arith.cmpf olt, %1212, %1066 : vector<2x128xf32>
    %1214 = arith.andi %1205, %1213 : vector<2x128xi1>
    %cst_209 = arith.constant 0.000000e+00 : f32
    %1215 = vector.broadcast %cst_209 : f32 to vector<2x128xf32>
    %1216 = arith.cmpf ogt, %1212, %1215 : vector<2x128xf32>
    %1217 = arith.andi %1214, %1216 : vector<2x128xi1>
    %1218 = vector.broadcast %1179 : f32 to vector<2x128xf32>
    %1219 = arith.mulf %1191, %1218 : vector<2x128xf32>
    %1220 = vector.broadcast %1180 : f32 to vector<2x128xf32>
    %1221 = arith.mulf %1198, %1220 : vector<2x128xf32>
    %1222 = arith.addf %1219, %1221 : vector<2x128xf32>
    %1223 = vector.broadcast %1141 : f32 to vector<2x128xf32>
    %1224 = arith.addf %1222, %1223 : vector<2x128xf32>
    %1225 = arith.select %1217, %1224, %1074 : vector<2x128xi1>, vector<2x128xf32>
    %1226 = vector.broadcast %1181 : f32 to vector<2x128xf32>
    %1227 = arith.mulf %1191, %1226 : vector<2x128xf32>
    %1228 = vector.broadcast %1182 : f32 to vector<2x128xf32>
    %1229 = arith.mulf %1198, %1228 : vector<2x128xf32>
    %1230 = arith.addf %1227, %1229 : vector<2x128xf32>
    %1231 = vector.broadcast %1144 : f32 to vector<2x128xf32>
    %1232 = arith.addf %1230, %1231 : vector<2x128xf32>
    %1233 = arith.select %1217, %1232, %1082 : vector<2x128xi1>, vector<2x128xf32>
    %1234 = vector.broadcast %1183 : f32 to vector<2x128xf32>
    %1235 = arith.mulf %1191, %1234 : vector<2x128xf32>
    %1236 = vector.broadcast %1184 : f32 to vector<2x128xf32>
    %1237 = arith.mulf %1198, %1236 : vector<2x128xf32>
    %1238 = arith.addf %1235, %1237 : vector<2x128xf32>
    %1239 = vector.broadcast %1147 : f32 to vector<2x128xf32>
    %1240 = arith.addf %1238, %1239 : vector<2x128xf32>
    %1241 = arith.select %1217, %1240, %1090 : vector<2x128xi1>, vector<2x128xf32>
    %cst_210 = arith.constant 1.000000e+00 : f32
    %1242 = vector.broadcast %cst_210 : f32 to vector<2x128xf32>
    %1243 = arith.select %1217, %1242, %1092 : vector<2x128xi1>, vector<2x128xf32>
    %1244 = tpu.concatenate %1225, %1233, %1241, %1243 in 0 : vector<2x128xf32>, vector<2x128xf32>, vector<2x128xf32>, vector<2x128xf32> -> vector<8x128xf32>
    %c0 = arith.constant 0 : index
    %c0_211 = arith.constant 0 : index
    %c0_212 = arith.constant 0 : index
    %1245 = vector.load %arg2[%c0, %c0_211, %c0_212] : memref<1x8x128xf32, #tpu.memory_space<vmem>>, vector<1x8x128xf32>
    %1246 = vector.shape_cast %1245 : vector<1x8x128xf32> to vector<8x128xf32>
    %1247 = vector.shape_cast %1244 : vector<8x128xf32> to vector<1x8x128xf32>
    tpu.vector_store %arg2[%c0, %c0_211, %c0_212], %1247 {strides = array<i32>} : memref<1x8x128xf32, #tpu.memory_space<vmem>>, vector<1x8x128xf32>,
    return
  }
  func.func @transform_0(%arg0: i32) -> i32 {
    %c0_i32 = arith.constant 0 : i32
    %c0_i32_0 = arith.constant 0 : i32
    return %c0_i32 : i32
  }
  func.func @transform_1(%arg0: i32) -> (i32, i32, i32) {
    %c0_i32 = arith.constant 0 : i32
    %c0_i32_0 = arith.constant 0 : i32
    %c0_i32_1 = arith.constant 0 : i32
    return %arg0, %c0_i32, %c0_i32_0 : i32, i32, i32
  }
}

</mosaic_0001>

<llo_original>
// kernel: tpu_custom_call.1
$region0: #{tpu_custom_call.1}
  #allocation0 [shape = 'u32[]', space=smem, size = 0x4, offset = 0x4, fixed_abs, tag = 'smem constant byte address 0x4 - core index']
  #allocation1 [shape = 'u32[144,128]{1,0:T(1,128)}', space=vmem, size = 0x12000, scoped, tag = 'internal scratch']
  %s0 = inlined_call_operand.hbm [shape: f32[288], index: 0, kind: input, shape index: {}]
  %s1 = inlined_call_operand.hbm [shape: f32[2,8,128], index: 1, kind: output, shape index: {}]
  %s2 = sld [smem:[#allocation0]]
  $region41: #{tpu_custom_call.1} parent=0
    _
  %s4 = ssub.s32 1, %s2
  %s5 = scalar_select 0, %s4, %s2
  $region1: #{tpu_custom_call.1} parent=0
    #allocation2 [shape = 'u8[1536]{0}', space=smem, size = 0x600, scoped, tag = 'input window, operand 0, single buffered']
    #allocation3 [shape = 's32[2]{0}', space=sflag, size = 0x8, scoped, tag = 'scoped memory for tpu_custom_call.1']
    #allocation4 [shape = 's32[2]{0}', space=sflag, size = 0x8, scoped, tag = 'scoped memory for tpu_custom_call.1']
    #allocation5 [shape = 'u8[8192]{0}', space=vmem, size = 0x2000, scoped, tag = 'output window, operand 0']
    %6 = vsyncpa [#allocation4], 0
    %7 = vsyncpa [#allocation3], 0
    %s8 = scalar_lea.sflag [#allocation3], 1
    %9 = vsyncpa %s8, 0
    loop: start=0, step=1, limit=4
    $region2: #{tpu_custom_call.1} parent=1 // loop_pre_header
      _
    $region3: #{tpu_custom_call.1} parent=1 // loop_header
      %s11 = sphi 0, %s15
      %p12 = scmp.ge.s32.totalorder %s11, 4
      %s19 = sphi 0, %s19
      %s21 = sphi 0, %s19
      %s22 = sphi 0, %s21
      %s36 = sphi 0, %s22
      %s42 = sphi 0, %s44
      %s45 = sphi 0, %s42
      %s46 = sphi 0, %s45
      %s62 = sphi 0, %s46
    $region4: #{tpu_custom_call.1} parent=1 // loop_header_branch
      %14 = sbr.rel (%p12) target = $region8
    $region5: #{tpu_custom_call.1} parent=1 // loop_body
      %s16 = ssub.s32 %s11, 1
      %s17 = ssub.s32 %s11, 2
      %s18 = sadd.s32 %s11, 1
      %s20 = sadd.s32 %s19, 1
      %p23 = scmp.eq.s32.totalorder %s11, 1
      %p24 = scmp.ne.s32.totalorder %s19, %s21
      %p25 = scmp.eq.s32.totalorder %s11, 0
      %p26 = por %p24, %p25
      %p27 = scmp.ne.s32.totalorder %s19, %s21
      %p28 = scmp.eq.s32.totalorder %s16, 1
      %p29 = por %p27, %p28
      %p30 = scmp.ne.s32.totalorder %s21, %s22
      %p31 = scmp.eq.s32.totalorder %s16, 0
      %p32 = por %p30, %p31
      %p33 = scmp.ne.s32.totalorder %s21, %s22
      %p34 = scmp.eq.s32.totalorder %s17, 1
      %p35 = por %p33, %p34
      %p37 = scmp.ne.s32.totalorder %s22, %s36
      %p38 = scmp.eq.s32.totalorder %s17, 0
      %p39 = por %p37, %p38
      %s40 = ssub.s32 %s11, %s18
      %p41 = scmp.eq.s32.totalorder %s40, 0
      %s43 = sadd.s32 %s42, 1
      %s44 = scalar_select %p41, %s42, %s43
      %p47 = pneg %p41
      %p48 = scmp.eq.s32.totalorder %s11, 1
      %p49 = por %p47, %p48
      %p50 = scmp.ne.s32.totalorder %s42, %s45
      %p51 = scmp.eq.s32.totalorder %s11, 0
      %p52 = por %p50, %p51
      %p53 = scmp.ne.s32.totalorder %s42, %s45
      %p54 = scmp.eq.s32.totalorder %s16, 1
      %p55 = por %p53, %p54
      %p56 = scmp.ne.s32.totalorder %s45, %s46
      %p57 = scmp.eq.s32.totalorder %s16, 0
      %p58 = por %p56, %p57
      %p59 = scmp.ne.s32.totalorder %s45, %s46
      %p60 = scmp.eq.s32.totalorder %s17, 1
      %p61 = por %p59, %p60
      %p63 = scmp.ne.s32.totalorder %s46, %s62
      %p64 = scmp.eq.s32.totalorder %s17, 0
      %p65 = por %p63, %p64
      %p66 = scmp.le.s32.totalorder 1, %s11
      %p67 = scmp.lt.s32.totalorder %s11, 3
      %p68 = pnand %p66, %p67
      %p69 = pneg %p68
      // Predicated region
      $region9: #{tpu_custom_call.1} parent=5 // pred_check
        _
      $region10: #{tpu_custom_call.1} parent=5 // pred_check_branch
        %71 = sbr.rel (%p68) target = $region12
      $region11: #{tpu_custom_call.1} parent=5 // pred_region
        %s72 = ssub.s32 %s11, 1
        // Predicated region
        $region13: #{tpu_custom_call.1} parent=11 // pred_check
          %p73 = pneg %p32
        $region14: #{tpu_custom_call.1} parent=11 // pred_check_branch
          %75 = sbr.rel (%p73) target = $region16
        $region15: #{tpu_custom_call.1} parent=11 // pred_region
          %s77 = ssub.s32 48, 48
          %78 = vsyncadd [#allocation4], %s77
          %81 = dma.hbm_to_smem %s0, 48, [#allocation2], [#allocation4]
        $region16: #{tpu_custom_call.1} parent=11 // pred_fallthru
          _
      $region12: #{tpu_custom_call.1} parent=5 // pred_fallthru
        _
      %p82 = scmp.lt.s32.totalorder %s11, 2
      // Predicated region
      $region17: #{tpu_custom_call.1} parent=5 // pred_check
        %p83 = pneg %p82
      $region18: #{tpu_custom_call.1} parent=5 // pred_check_branch
        %85 = sbr.rel (%p83) target = $region20
      $region19: #{tpu_custom_call.1} parent=5 // pred_region
        _
      $region20: #{tpu_custom_call.1} parent=5 // pred_fallthru
        _
      %p86 = scmp.le.s32.totalorder 1, %s11
      %p87 = scmp.lt.s32.totalorder %s11, 3
      %p88 = pnand %p86, %p87
      %p89 = pneg %p88
      // Predicated region
      $region21: #{tpu_custom_call.1} parent=5 // pred_check
        _
      $region22: #{tpu_custom_call.1} parent=5 // pred_check_branch
        %91 = sbr.rel (%p88) target = $region24
      $region23: #{tpu_custom_call.1} parent=5 // pred_region
        %s92 = ssub.s32 %s11, 1
        // Predicated region
        $region25: #{tpu_custom_call.1} parent=23 // pred_check
          %p93 = pneg %p32
        $region26: #{tpu_custom_call.1} parent=23 // pred_check_branch
          %95 = sbr.rel (%p93) target = $region28
        $region27: #{tpu_custom_call.1} parent=23 // pred_region
          %96 = dma.done [#allocation4], 48
        $region28: #{tpu_custom_call.1} parent=23 // pred_fallthru
          _
        %97 = sfence
        %p98 = pneg %p32
        %p99 = pneg %p29
        %p100 = pneg %p58
        %p101 = pneg %p55
        %s102 = sand.u32 %s45, 1
        %s103 = scalar_lea.sflag [#allocation3], %s102
        %s104 = sand.u32 %s45, 1
        %s105 = smul.addr %s104, 8
        %s106 = scalar_lea.vmem [#allocation5], %s105
        %s107 = smul.u32 %s16, 144
        %v108 = vlaneseq
        %v109 = vshrl.u32 %v108, 7
        %v110 = vmul.u32 %v109, 128
        %v111 = vlaneseq
        %v112 = vand.u32 %v111, 127
        %v113 = vadd.s32 %v110, %v112
        %v114 = vshra.s32 %v113, 4
        %v115 = vcvt.s32.f32 %v114
        %v116 = vand.u32 %v113, 15
        %v117 = vcvt.s32.f32 %v116
        %v118 = vadd.f32 %v117, 0.5
        %v119 = vmul.f32 %v118, 0.125
        %v120 = vsub.f32 1.0, %v119
        %v121 = vadd.f32 %v115, 0.5
        %v122 = vmul.f32 %v121, 0.125
        %v123 = vsub.f32 1.0, %v122
        %s124 = sld [smem:[#allocation2 + %s107]]
        %s125 = sadd.s32 %s107, 1
        %s126 = sld [smem:[#allocation2 + %s125]]
        %s127 = sadd.s32 %s107, 2
        %s128 = sld [smem:[#allocation2 + %s127]]
        %s129 = sadd.s32 %s107, 3
        %s130 = sld [smem:[#allocation2 + %s129]]
        %s131 = sadd.s32 %s107, 4
        %s132 = sld [smem:[#allocation2 + %s131]]
        %s133 = sadd.s32 %s107, 5
        %s134 = sld [smem:[#allocation2 + %s133]]
        %s135 = sadd.s32 %s107, 6
        %s136 = sld [smem:[#allocation2 + %s135]]
        %s137 = sadd.s32 %s107, 7
        %s138 = sld [smem:[#allocation2 + %s137]]
        %s139 = sadd.s32 %s107, 8
        %s140 = sld [smem:[#allocation2 + %s139]]
        %s141 = sadd.s32 %s107, 9
        %s142 = sld [smem:[#allocation2 + %s141]]
        %s143 = sadd.s32 %s107, 10
        %s144 = sld [smem:[#allocation2 + %s143]]
        %s145 = sadd.s32 %s107, 11
        %s146 = sld [smem:[#allocation2 + %s145]]
        %s147 = sadd.s32 %s107, 12
        %s148 = sld [smem:[#allocation2 + %s147]]
        %s149 = sadd.s32 %s107, 13
        %s150 = sld [smem:[#allocation2 + %s149]]
        %s151 = sadd.s32 %s107, 14
        %s152 = sld [smem:[#allocation2 + %s151]]
        %s153 = sadd.s32 %s107, 15
        %s154 = sld [smem:[#allocation2 + %s153]]
        %s155 = sadd.s32 %s107, 16
        %s156 = sld [smem:[#allocation2 + %s155]]
        %s157 = sadd.s32 %s107, 17
        %s158 = sld [smem:[#allocation2 + %s157]]
        %s159 = ssub.f32 %s130, %s124
        %s160 = ssub.f32 %s138, %s126
        %s161 = smul.f32 %s159, %s160
        %s162 = ssub.f32 %s132, %s126
        %s163 = ssub.f32 %s136, %s124
        %s164 = smul.f32 %s162, %s163
        %s165 = ssub.f32 %s161, %s164
        %s166 = sand.u32 2147483647, %s165
        %p167 = scmp.gt.f32.partialorder %s166, 1e-08
        %s168 = scalar_select %p167, %s165, 1.0
        %v169 = vstv %s168
        %v170 = vrcp.pop %v169
        %s171 = vtos %v170
        %s172 = scalar_select %p167, %s171, 0.0
        %s173 = ssub.f32 %s132, %s138
        %s174 = smul.f32 %s173, %s172
        %s175 = ssub.f32 %s136, %s130
        %s176 = smul.f32 %s175, %s172
        %s177 = smul.f32 %s130, %s138
        %s178 = smul.f32 %s132, %s136
        %s179 = ssub.f32 %s177, %s178
        %s180 = smul.f32 %s179, %s172
        %s181 = scalar_select %p167, %s180, -1.0
        %s182 = smul.f32 %s160, %s172
        %s183 = ssub.f32 %s124, %s136
        %s184 = smul.f32 %s183, %s172
        %s185 = smul.f32 %s136, %s126
        %s186 = smul.f32 %s138, %s124
        %s187 = ssub.f32 %s185, %s186
        %s188 = smul.f32 %s187, %s172
        %s189 = ssub.f32 %s128, %s140
        %s190 = ssub.f32 %s134, %s140
        %s191 = ssub.f32 %s142, %s154
        %s192 = ssub.f32 %s148, %s154
        %s193 = ssub.f32 %s144, %s156
        %s194 = ssub.f32 %s150, %s156
        %s195 = ssub.f32 %s146, %s158
        %s196 = ssub.f32 %s152, %s158
        %v197 = vstv %s174
        %v198 = vmul.f32 %v197, %v120
        %v199 = vstv %s176
        %v200 = vmul.f32 %v199, %v123
        %v201 = vadd.f32 %v198, %v200
        %v202 = vstv %s181
        %v203 = vadd.f32 %v201, %v202
        %v204 = vstv %s182
        %v205 = vmul.f32 %v204, %v120
        %v206 = vstv %s184
        %v207 = vmul.f32 %v206, %v123
        %v208 = vadd.f32 %v205, %v207
        %v209 = vstv %s188
        %v210 = vadd.f32 %v208, %v209
        %v211 = vsub.f32 1.0, %v203
        %v212 = vsub.f32 %v211, %v210
        %v213 = vmin.f32 %v203, %v210
        %v214 = vmin.f32 %v213, %v212
        %vm215 = vcmp.ge.f32.partialorder %v214, 0.0
        %v216 = vstv %s189
        %v217 = vmul.f32 %v203, %v216
        %v218 = vstv %s190
        %v219 = vmul.f32 %v210, %v218
        %v220 = vadd.f32 %v217, %v219
        %v221 = vstv %s140
        %v222 = vadd.f32 %v220, %v221
        %vm223 = vcmp.lt.f32.partialorder %v222, 1e+10
        %vm224 = vmand %vm215, %vm223
        %vm225 = vcmp.gt.f32.partialorder %v222, 0.0
        %vm226 = vmand %vm224, %vm225
        %v227 = vsel %vm226, %v222, 1e+10
        %v228 = vstv %s191
        %v229 = vmul.f32 %v203, %v228
        %v230 = vstv %s192
        %v231 = vmul.f32 %v210, %v230
        %v232 = vadd.f32 %v229, %v231
        %v233 = vstv %s154
        %v234 = vadd.f32 %v232, %v233
        %v235 = vsel %vm226, %v234, 1.0
        %v236 = vstv %s193
        %v237 = vmul.f32 %v203, %v236
        %v238 = vstv %s194
        %v239 = vmul.f32 %v210, %v238
        %v240 = vadd.f32 %v237, %v239
        %v241 = vstv %s156
        %v242 = vadd.f32 %v240, %v241
        %v243 = vsel %vm226, %v242, 1.0
        %v244 = vstv %s195
        %v245 = vmul.f32 %v203, %v244
        %v246 = vstv %s196
        %v247 = vmul.f32 %v210, %v246
        %v248 = vadd.f32 %v245, %v247
        %v249 = vstv %s158
        %v250 = vadd.f32 %v248, %v249
        %v251 = vsel %vm226, %v250, 1.0
        %v252 = vsel %vm226, 1.0, 0.0
        %s253 = sadd.s32 %s107, 18
        %s254 = sld [smem:[#allocation2 + %s253]]
        %s255 = sadd.s32 %s107, 19
        %s256 = sld [smem:[#allocation2 + %s255]]
        %s257 = sadd.s32 %s107, 20
        %s258 = sld [smem:[#allocation2 + %s257]]
        %s259 = sadd.s32 %s107, 21
        %s260 = sld [smem:[#allocation2 + %s259]]
        %s261 = sadd.s32 %s107, 22
        %s262 = sld [smem:[#allocation2 + %s261]]
        %s263 = sadd.s32 %s107, 23
        %s264 = sld [smem:[#allocation2 + %s263]]
        %s265 = sadd.s32 %s107, 24
        %s266 = sld [smem:[#allocation2 + %s265]]
        %s267 = sadd.s32 %s107, 25
        %s268 = sld [smem:[#allocation2 + %s267]]
        %s269 = sadd.s32 %s107, 26
        %s270 = sld [smem:[#allocation2 + %s269]]
        %s271 = sadd.s32 %s107, 27
        %s272 = sld [smem:[#allocation2 + %s271]]
        %s273 = sadd.s32 %s107, 28
        %s274 = sld [smem:[#allocation2 + %s273]]
        %s275 = sadd.s32 %s107, 29
        %s276 = sld [smem:[#allocation2 + %s275]]
        %s277 = sadd.s32 %s107, 30
        %s278 = sld [smem:[#allocation2 + %s277]]
        %s279 = sadd.s32 %s107, 31
        %s280 = sld [smem:[#allocation2 + %s279]]
        %s281 = sadd.s32 %s107, 32
        %s282 = sld [smem:[#allocation2 + %s281]]
        %s283 = sadd.s32 %s107, 33
        %s284 = sld [smem:[#allocation2 + %s283]]
        %s285 = sadd.s32 %s107, 34
        %s286 = sld [smem:[#allocation2 + %s285]]
        %s287 = sadd.s32 %s107, 35
        %s288 = sld [smem:[#allocation2 + %s287]]
        %s289 = ssub.f32 %s260, %s254
        %s290 = ssub.f32 %s268, %s256
        %s291 = smul.f32 %s289, %s290
        %s292 = ssub.f32 %s262, %s256
        %s293 = ssub.f32 %s266, %s254
        %s294 = smul.f32 %s292, %s293
        %s295 = ssub.f32 %s291, %s294
        %s296 = sand.u32 2147483647, %s295
        %p297 = scmp.gt.f32.partialorder %s296, 1e-08
        %s298 = scalar_select %p297, %s295, 1.0
        %v299 = vstv %s298
        %v300 = vrcp.pop %v299
        %s301 = vtos %v300
        %s302 = scalar_select %p297, %s301, 0.0
        %s303 = ssub.f32 %s262, %s268
        %s304 = smul.f32 %s303, %s302
        %s305 = ssub.f32 %s266, %s260
        %s306 = smul.f32 %s305, %s302
        %s307 = smul.f32 %s260, %s268
        %s308 = smul.f32 %s262, %s266
        %s309 = ssub.f32 %s307, %s308
        %s310 = smul.f32 %s309, %s302
        %s311 = scalar_select %p297, %s310, -1.0
        %s312 = smul.f32 %s290, %s302
        %s313 = ssub.f32 %s254, %s266
        %s314 = smul.f32 %s313, %s302
        %s315 = smul.f32 %s266, %s256
        %s316 = smul.f32 %s268, %s254
        %s317 = ssub.f32 %s315, %s316
        %s318 = smul.f32 %s317, %s302
        %s319 = ssub.f32 %s258, %s270
        %s320 = ssub.f32 %s264, %s270
        %s321 = ssub.f32 %s272, %s284
        %s322 = ssub.f32 %s278, %s284
        %s323 = ssub.f32 %s274, %s286
        %s324 = ssub.f32 %s280, %s286
        %s325 = ssub.f32 %s276, %s288
        %s326 = ssub.f32 %s282, %s288
        %v327 = vstv %s304
        %v328 = vmul.f32 %v327, %v120
        %v329 = vstv %s306
        %v330 = vmul.f32 %v329, %v123
        %v331 = vadd.f32 %v328, %v330
        %v332 = vstv %s311
        %v333 = vadd.f32 %v331, %v332
        %v334 = vstv %s312
        %v335 = vmul.f32 %v334, %v120
        %v336 = vstv %s314
        %v337 = vmul.f32 %v336, %v123
        %v338 = vadd.f32 %v335, %v337
        %v339 = vstv %s318
        %v340 = vadd.f32 %v338, %v339
        %v341 = vsub.f32 1.0, %v333
        %v342 = vsub.f32 %v341, %v340
        %v343 = vmin.f32 %v333, %v340
        %v344 = vmin.f32 %v343, %v342
        %vm345 = vcmp.ge.f32.partialorder %v344, 0.0
        %v346 = vstv %s319
        %v347 = vmul.f32 %v333, %v346
        %v348 = vstv %s320
        %v349 = vmul.f32 %v340, %v348
        %v350 = vadd.f32 %v347, %v349
        %v351 = vstv %s270
        %v352 = vadd.f32 %v350, %v351
        %vm353 = vcmp.lt.f32.partialorder %v352, %v227
        %vm354 = vmand %vm345, %vm353
        %vm355 = vcmp.gt.f32.partialorder %v352, 0.0
        %vm356 = vmand %vm354, %vm355
        %v357 = vsel %vm356, %v352, %v227
        %v358 = vstv %s321
        %v359 = vmul.f32 %v333, %v358
        %v360 = vstv %s322
        %v361 = vmul.f32 %v340, %v360
        %v362 = vadd.f32 %v359, %v361
        %v363 = vstv %s284
        %v364 = vadd.f32 %v362, %v363
        %v365 = vsel %vm356, %v364, %v235
        %v366 = vstv %s323
        %v367 = vmul.f32 %v333, %v366
        %v368 = vstv %s324
        %v369 = vmul.f32 %v340, %v368
        %v370 = vadd.f32 %v367, %v369
        %v371 = vstv %s286
        %v372 = vadd.f32 %v370, %v371
        %v373 = vsel %vm356, %v372, %v243
        %v374 = vstv %s325
        %v375 = vmul.f32 %v333, %v374
        %v376 = vstv %s326
        %v377 = vmul.f32 %v340, %v376
        %v378 = vadd.f32 %v375, %v377
        %v379 = vstv %s288
        %v380 = vadd.f32 %v378, %v379
        %v381 = vsel %vm356, %v380, %v251
        %v382 = vsel %vm356, 1.0, %v252
        %s383 = sadd.s32 %s107, 36
        %s384 = sld [smem:[#allocation2 + %s383]]
        %s385 = sadd.s32 %s107, 37
        %s386 = sld [smem:[#allocation2 + %s385]]
        %s387 = sadd.s32 %s107, 38
        %s388 = sld [smem:[#allocation2 + %s387]]
        %s389 = sadd.s32 %s107, 39
        %s390 = sld [smem:[#allocation2 + %s389]]
        %s391 = sadd.s32 %s107, 40
        %s392 = sld [smem:[#allocation2 + %s391]]
        %s393 = sadd.s32 %s107, 41
        %s394 = sld [smem:[#allocation2 + %s393]]
        %s395 = sadd.s32 %s107, 42
        %s396 = sld [smem:[#allocation2 + %s395]]
        %s397 = sadd.s32 %s107, 43
        %s398 = sld [smem:[#allocation2 + %s397]]
        %s399 = sadd.s32 %s107, 44
        %s400 = sld [smem:[#allocation2 + %s399]]
        %s401 = sadd.s32 %s107, 45
        %s402 = sld [smem:[#allocation2 + %s401]]
        %s403 = sadd.s32 %s107, 46
        %s404 = sld [smem:[#allocation2 + %s403]]
        %s405 = sadd.s32 %s107, 47
        %s406 = sld [smem:[#allocation2 + %s405]]
        %s407 = sadd.s32 %s107, 48
        %s408 = sld [smem:[#allocation2 + %s407]]
        %s409 = sadd.s32 %s107, 49
        %s410 = sld [smem:[#allocation2 + %s409]]
        %s411 = sadd.s32 %s107, 50
        %s412 = sld [smem:[#allocation2 + %s411]]
        %s413 = sadd.s32 %s107, 51
        %s414 = sld [smem:[#allocation2 + %s413]]
        %s415 = sadd.s32 %s107, 52
        %s416 = sld [smem:[#allocation2 + %s415]]
        %s417 = sadd.s32 %s107, 53
        %s418 = sld [smem:[#allocation2 + %s417]]
        %s419 = ssub.f32 %s390, %s384
        %s420 = ssub.f32 %s398, %s386
        %s421 = smul.f32 %s419, %s420
        %s422 = ssub.f32 %s392, %s386
        %s423 = ssub.f32 %s396, %s384
        %s424 = smul.f32 %s422, %s423
        %s425 = ssub.f32 %s421, %s424
        %s426 = sand.u32 2147483647, %s425
        %p427 = scmp.gt.f32.partialorder %s426, 1e-08
        %s428 = scalar_select %p427, %s425, 1.0
        %v429 = vstv %s428
        %v430 = vrcp.pop %v429
        %s431 = vtos %v430
        %s432 = scalar_select %p427, %s431, 0.0
        %s433 = ssub.f32 %s392, %s398
        %s434 = smul.f32 %s433, %s432
        %s435 = ssub.f32 %s396, %s390
        %s436 = smul.f32 %s435, %s432
        %s437 = smul.f32 %s390, %s398
        %s438 = smul.f32 %s392, %s396
        %s439 = ssub.f32 %s437, %s438
        %s440 = smul.f32 %s439, %s432
        %s441 = scalar_select %p427, %s440, -1.0
        %s442 = smul.f32 %s420, %s432
        %s443 = ssub.f32 %s384, %s396
        %s444 = smul.f32 %s443, %s432
        %s445 = smul.f32 %s396, %s386
        %s446 = smul.f32 %s398, %s384
        %s447 = ssub.f32 %s445, %s446
        %s448 = smul.f32 %s447, %s432
        %s449 = ssub.f32 %s388, %s400
        %s450 = ssub.f32 %s394, %s400
        %s451 = ssub.f32 %s402, %s414
        %s452 = ssub.f32 %s408, %s414
        %s453 = ssub.f32 %s404, %s416
        %s454 = ssub.f32 %s410, %s416
        %s455 = ssub.f32 %s406, %s418
        %s456 = ssub.f32 %s412, %s418
        %v457 = vstv %s434
        %v458 = vmul.f32 %v457, %v120
        %v459 = vstv %s436
        %v460 = vmul.f32 %v459, %v123
        %v461 = vadd.f32 %v458, %v460
        %v462 = vstv %s441
        %v463 = vadd.f32 %v461, %v462
        %v464 = vstv %s442
        %v465 = vmul.f32 %v464, %v120
        %v466 = vstv %s444
        %v467 = vmul.f32 %v466, %v123
        %v468 = vadd.f32 %v465, %v467
        %v469 = vstv %s448
        %v470 = vadd.f32 %v468, %v469
        %v471 = vsub.f32 1.0, %v463
        %v472 = vsub.f32 %v471, %v470
        %v473 = vmin.f32 %v463, %v470
        %v474 = vmin.f32 %v473, %v472
        %vm475 = vcmp.ge.f32.partialorder %v474, 0.0
        %v476 = vstv %s449
        %v477 = vmul.f32 %v463, %v476
        %v478 = vstv %s450
        %v479 = vmul.f32 %v470, %v478
        %v480 = vadd.f32 %v477, %v479
        %v481 = vstv %s400
        %v482 = vadd.f32 %v480, %v481
        %vm483 = vcmp.lt.f32.partialorder %v482, %v357
        %vm484 = vmand %vm475, %vm483
        %vm485 = vcmp.gt.f32.partialorder %v482, 0.0
        %vm486 = vmand %vm484, %vm485
        %v487 = vsel %vm486, %v482, %v357
        %v488 = vstv %s451
        %v489 = vmul.f32 %v463, %v488
        %v490 = vstv %s452
        %v491 = vmul.f32 %v470, %v490
        %v492 = vadd.f32 %v489, %v491
        %v493 = vstv %s414
        %v494 = vadd.f32 %v492, %v493
        %v495 = vsel %vm486, %v494, %v365
        %v496 = vstv %s453
        %v497 = vmul.f32 %v463, %v496
        %v498 = vstv %s454
        %v499 = vmul.f32 %v470, %v498
        %v500 = vadd.f32 %v497, %v499
        %v501 = vstv %s416
        %v502 = vadd.f32 %v500, %v501
        %v503 = vsel %vm486, %v502, %v373
        %v504 = vstv %s455
        %v505 = vmul.f32 %v463, %v504
        %v506 = vstv %s456
        %v507 = vmul.f32 %v470, %v506
        %v508 = vadd.f32 %v505, %v507
        %v509 = vstv %s418
        %v510 = vadd.f32 %v508, %v509
        %v511 = vsel %vm486, %v510, %v381
        %v512 = vsel %vm486, 1.0, %v382
        %s513 = sadd.s32 %s107, 54
        %s514 = sld [smem:[#allocation2 + %s513]]
        %s515 = sadd.s32 %s107, 55
        %s516 = sld [smem:[#allocation2 + %s515]]
        %s517 = sadd.s32 %s107, 56
        %s518 = sld [smem:[#allocation2 + %s517]]
        %s519 = sadd.s32 %s107, 57
        %s520 = sld [smem:[#allocation2 + %s519]]
        %s521 = sadd.s32 %s107, 58
        %s522 = sld [smem:[#allocation2 + %s521]]
        %s523 = sadd.s32 %s107, 59
        %s524 = sld [smem:[#allocation2 + %s523]]
        %s525 = sadd.s32 %s107, 60
        %s526 = sld [smem:[#allocation2 + %s525]]
        %s527 = sadd.s32 %s107, 61
        %s528 = sld [smem:[#allocation2 + %s527]]
        %s529 = sadd.s32 %s107, 62
        %s530 = sld [smem:[#allocation2 + %s529]]
        %s531 = sadd.s32 %s107, 63
        %s532 = sld [smem:[#allocation2 + %s531]]
        %s533 = sadd.s32 %s107, 64
        %s534 = sld [smem:[#allocation2 + %s533]]
        %s535 = sadd.s32 %s107, 65
        %s536 = sld [smem:[#allocation2 + %s535]]
        %s537 = sadd.s32 %s107, 66
        %s538 = sld [smem:[#allocation2 + %s537]]
        %s539 = sadd.s32 %s107, 67
        %s540 = sld [smem:[#allocation2 + %s539]]
        %s541 = sadd.s32 %s107, 68
        %s542 = sld [smem:[#allocation2 + %s541]]
        %s543 = sadd.s32 %s107, 69
        %s544 = sld [smem:[#allocation2 + %s543]]
        %s545 = sadd.s32 %s107, 70
        %s546 = sld [smem:[#allocation2 + %s545]]
        %s547 = sadd.s32 %s107, 71
        %s548 = sld [smem:[#allocation2 + %s547]]
        %s549 = ssub.f32 %s520, %s514
        %s550 = ssub.f32 %s528, %s516
        %s551 = smul.f32 %s549, %s550
        %s552 = ssub.f32 %s522, %s516
        %s553 = ssub.f32 %s526, %s514
        %s554 = smul.f32 %s552, %s553
        %s555 = ssub.f32 %s551, %s554
        %s556 = sand.u32 2147483647, %s555
        %p557 = scmp.gt.f32.partialorder %s556, 1e-08
        %s558 = scalar_select %p557, %s555, 1.0
        %v559 = vstv %s558
        %v560 = vrcp.pop %v559
        %s561 = vtos %v560
        %s562 = scalar_select %p557, %s561, 0.0
        %s563 = ssub.f32 %s522, %s528
        %s564 = smul.f32 %s563, %s562
        %s565 = ssub.f32 %s526, %s520
        %s566 = smul.f32 %s565, %s562
        %s567 = smul.f32 %s520, %s528
        %s568 = smul.f32 %s522, %s526
        %s569 = ssub.f32 %s567, %s568
        %s570 = smul.f32 %s569, %s562
        %s571 = scalar_select %p557, %s570, -1.0
        %s572 = smul.f32 %s550, %s562
        %s573 = ssub.f32 %s514, %s526
        %s574 = smul.f32 %s573, %s562
        %s575 = smul.f32 %s526, %s516
        %s576 = smul.f32 %s528, %s514
        %s577 = ssub.f32 %s575, %s576
        %s578 = smul.f32 %s577, %s562
        %s579 = ssub.f32 %s518, %s530
        %s580 = ssub.f32 %s524, %s530
        %s581 = ssub.f32 %s532, %s544
        %s582 = ssub.f32 %s538, %s544
        %s583 = ssub.f32 %s534, %s546
        %s584 = ssub.f32 %s540, %s546
        %s585 = ssub.f32 %s536, %s548
        %s586 = ssub.f32 %s542, %s548
        %v587 = vstv %s564
        %v588 = vmul.f32 %v587, %v120
        %v589 = vstv %s566
        %v590 = vmul.f32 %v589, %v123
        %v591 = vadd.f32 %v588, %v590
        %v592 = vstv %s571
        %v593 = vadd.f32 %v591, %v592
        %v594 = vstv %s572
        %v595 = vmul.f32 %v594, %v120
        %v596 = vstv %s574
        %v597 = vmul.f32 %v596, %v123
        %v598 = vadd.f32 %v595, %v597
        %v599 = vstv %s578
        %v600 = vadd.f32 %v598, %v599
        %v601 = vsub.f32 1.0, %v593
        %v602 = vsub.f32 %v601, %v600
        %v603 = vmin.f32 %v593, %v600
        %v604 = vmin.f32 %v603, %v602
        %vm605 = vcmp.ge.f32.partialorder %v604, 0.0
        %v606 = vstv %s579
        %v607 = vmul.f32 %v593, %v606
        %v608 = vstv %s580
        %v609 = vmul.f32 %v600, %v608
        %v610 = vadd.f32 %v607, %v609
        %v611 = vstv %s530
        %v612 = vadd.f32 %v610, %v611
        %vm613 = vcmp.lt.f32.partialorder %v612, %v487
        %vm614 = vmand %vm605, %vm613
        %vm615 = vcmp.gt.f32.partialorder %v612, 0.0
        %vm616 = vmand %vm614, %vm615
        %v617 = vsel %vm616, %v612, %v487
        %v618 = vstv %s581
        %v619 = vmul.f32 %v593, %v618
        %v620 = vstv %s582
        %v621 = vmul.f32 %v600, %v620
        %v622 = vadd.f32 %v619, %v621
        %v623 = vstv %s544
        %v624 = vadd.f32 %v622, %v623
        %v625 = vsel %vm616, %v624, %v495
        %v626 = vstv %s583
        %v627 = vmul.f32 %v593, %v626
        %v628 = vstv %s584
        %v629 = vmul.f32 %v600, %v628
        %v630 = vadd.f32 %v627, %v629
        %v631 = vstv %s546
        %v632 = vadd.f32 %v630, %v631
        %v633 = vsel %vm616, %v632, %v503
        %v634 = vstv %s585
        %v635 = vmul.f32 %v593, %v634
        %v636 = vstv %s586
        %v637 = vmul.f32 %v600, %v636
        %v638 = vadd.f32 %v635, %v637
        %v639 = vstv %s548
        %v640 = vadd.f32 %v638, %v639
        %v641 = vsel %vm616, %v640, %v511
        %v642 = vsel %vm616, 1.0, %v512
        %s643 = sadd.s32 %s107, 72
        %s644 = sld [smem:[#allocation2 + %s643]]
        %s645 = sadd.s32 %s107, 73
        %s646 = sld [smem:[#allocation2 + %s645]]
        %s647 = sadd.s32 %s107, 74
        %s648 = sld [smem:[#allocation2 + %s647]]
        %s649 = sadd.s32 %s107, 75
        %s650 = sld [smem:[#allocation2 + %s649]]
        %s651 = sadd.s32 %s107, 76
        %s652 = sld [smem:[#allocation2 + %s651]]
        %s653 = sadd.s32 %s107, 77
        %s654 = sld [smem:[#allocation2 + %s653]]
        %s655 = sadd.s32 %s107, 78
        %s656 = sld [smem:[#allocation2 + %s655]]
        %s657 = sadd.s32 %s107, 79
        %s658 = sld [smem:[#allocation2 + %s657]]
        %s659 = sadd.s32 %s107, 80
        %s660 = sld [smem:[#allocation2 + %s659]]
        %s661 = sadd.s32 %s107, 81
        %s662 = sld [smem:[#allocation2 + %s661]]
        %s663 = sadd.s32 %s107, 82
        %s664 = sld [smem:[#allocation2 + %s663]]
        %s665 = sadd.s32 %s107, 83
        %s666 = sld [smem:[#allocation2 + %s665]]
        %s667 = sadd.s32 %s107, 84
        %s668 = sld [smem:[#allocation2 + %s667]]
        %s669 = sadd.s32 %s107, 85
        %s670 = sld [smem:[#allocation2 + %s669]]
        %s671 = sadd.s32 %s107, 86
        %s672 = sld [smem:[#allocation2 + %s671]]
        %s673 = sadd.s32 %s107, 87
        %s674 = sld [smem:[#allocation2 + %s673]]
        %s675 = sadd.s32 %s107, 88
        %s676 = sld [smem:[#allocation2 + %s675]]
        %s677 = sadd.s32 %s107, 89
        %s678 = sld [smem:[#allocation2 + %s677]]
        %s679 = ssub.f32 %s650, %s644
        %s680 = ssub.f32 %s658, %s646
        %s681 = smul.f32 %s679, %s680
        %s682 = ssub.f32 %s652, %s646
        %s683 = ssub.f32 %s656, %s644
        %s684 = smul.f32 %s682, %s683
        %s685 = ssub.f32 %s681, %s684
        %s686 = sand.u32 2147483647, %s685
        %p687 = scmp.gt.f32.partialorder %s686, 1e-08
        %s688 = scalar_select %p687, %s685, 1.0
        %v689 = vstv %s688
        %v690 = vrcp.pop %v689
        %s691 = vtos %v690
        %s692 = scalar_select %p687, %s691, 0.0
        %s693 = ssub.f32 %s652, %s658
        %s694 = smul.f32 %s693, %s692
        %s695 = ssub.f32 %s656, %s650
        %s696 = smul.f32 %s695, %s692
        %s697 = smul.f32 %s650, %s658
        %s698 = smul.f32 %s652, %s656
        %s699 = ssub.f32 %s697, %s698
        %s700 = smul.f32 %s699, %s692
        %s701 = scalar_select %p687, %s700, -1.0
        %s702 = smul.f32 %s680, %s692
        %s703 = ssub.f32 %s644, %s656
        %s704 = smul.f32 %s703, %s692
        %s705 = smul.f32 %s656, %s646
        %s706 = smul.f32 %s658, %s644
        %s707 = ssub.f32 %s705, %s706
        %s708 = smul.f32 %s707, %s692
        %s709 = ssub.f32 %s648, %s660
        %s710 = ssub.f32 %s654, %s660
        %s711 = ssub.f32 %s662, %s674
        %s712 = ssub.f32 %s668, %s674
        %s713 = ssub.f32 %s664, %s676
        %s714 = ssub.f32 %s670, %s676
        %s715 = ssub.f32 %s666, %s678
        %s716 = ssub.f32 %s672, %s678
        %v717 = vstv %s694
        %v718 = vmul.f32 %v717, %v120
        %v719 = vstv %s696
        %v720 = vmul.f32 %v719, %v123
        %v721 = vadd.f32 %v718, %v720
        %v722 = vstv %s701
        %v723 = vadd.f32 %v721, %v722
        %v724 = vstv %s702
        %v725 = vmul.f32 %v724, %v120
        %v726 = vstv %s704
        %v727 = vmul.f32 %v726, %v123
        %v728 = vadd.f32 %v725, %v727
        %v729 = vstv %s708
        %v730 = vadd.f32 %v728, %v729
        %v731 = vsub.f32 1.0, %v723
        %v732 = vsub.f32 %v731, %v730
        %v733 = vmin.f32 %v723, %v730
        %v734 = vmin.f32 %v733, %v732
        %vm735 = vcmp.ge.f32.partialorder %v734, 0.0
        %v736 = vstv %s709
        %v737 = vmul.f32 %v723, %v736
        %v738 = vstv %s710
        %v739 = vmul.f32 %v730, %v738
        %v740 = vadd.f32 %v737, %v739
        %v741 = vstv %s660
        %v742 = vadd.f32 %v740, %v741
        %vm743 = vcmp.lt.f32.partialorder %v742, %v617
        %vm744 = vmand %vm735, %vm743
        %vm745 = vcmp.gt.f32.partialorder %v742, 0.0
        %vm746 = vmand %vm744, %vm745
        %v747 = vsel %vm746, %v742, %v617
        %v748 = vstv %s711
        %v749 = vmul.f32 %v723, %v748
        %v750 = vstv %s712
        %v751 = vmul.f32 %v730, %v750
        %v752 = vadd.f32 %v749, %v751
        %v753 = vstv %s674
        %v754 = vadd.f32 %v752, %v753
        %v755 = vsel %vm746, %v754, %v625
        %v756 = vstv %s713
        %v757 = vmul.f32 %v723, %v756
        %v758 = vstv %s714
        %v759 = vmul.f32 %v730, %v758
        %v760 = vadd.f32 %v757, %v759
        %v761 = vstv %s676
        %v762 = vadd.f32 %v760, %v761
        %v763 = vsel %vm746, %v762, %v633
        %v764 = vstv %s715
        %v765 = vmul.f32 %v723, %v764
        %v766 = vstv %s716
        %v767 = vmul.f32 %v730, %v766
        %v768 = vadd.f32 %v765, %v767
        %v769 = vstv %s678
        %v770 = vadd.f32 %v768, %v769
        %v771 = vsel %vm746, %v770, %v641
        %v772 = vsel %vm746, 1.0, %v642
        %s773 = sadd.s32 %s107, 90
        %s774 = sld [smem:[#allocation2 + %s773]]
        %s775 = sadd.s32 %s107, 91
        %s776 = sld [smem:[#allocation2 + %s775]]
        %s777 = sadd.s32 %s107, 92
        %s778 = sld [smem:[#allocation2 + %s777]]
        %s779 = sadd.s32 %s107, 93
        %s780 = sld [smem:[#allocation2 + %s779]]
        %s781 = sadd.s32 %s107, 94
        %s782 = sld [smem:[#allocation2 + %s781]]
        %s783 = sadd.s32 %s107, 95
        %s784 = sld [smem:[#allocation2 + %s783]]
        %s785 = sadd.s32 %s107, 96
        %s786 = sld [smem:[#allocation2 + %s785]]
        %s787 = sadd.s32 %s107, 97
        %s788 = sld [smem:[#allocation2 + %s787]]
        %s789 = sadd.s32 %s107, 98
        %s790 = sld [smem:[#allocation2 + %s789]]
        %s791 = sadd.s32 %s107, 99
        %s792 = sld [smem:[#allocation2 + %s791]]
        %s793 = sadd.s32 %s107, 100
        %s794 = sld [smem:[#allocation2 + %s793]]
        %s795 = sadd.s32 %s107, 101
        %s796 = sld [smem:[#allocation2 + %s795]]
        %s797 = sadd.s32 %s107, 102
        %s798 = sld [smem:[#allocation2 + %s797]]
        %s799 = sadd.s32 %s107, 103
        %s800 = sld [smem:[#allocation2 + %s799]]
        %s801 = sadd.s32 %s107, 104
        %s802 = sld [smem:[#allocation2 + %s801]]
        %s803 = sadd.s32 %s107, 105
        %s804 = sld [smem:[#allocation2 + %s803]]
        %s805 = sadd.s32 %s107, 106
        %s806 = sld [smem:[#allocation2 + %s805]]
        %s807 = sadd.s32 %s107, 107
        %s808 = sld [smem:[#allocation2 + %s807]]
        %s809 = ssub.f32 %s780, %s774
        %s810 = ssub.f32 %s788, %s776
        %s811 = smul.f32 %s809, %s810
        %s812 = ssub.f32 %s782, %s776
        %s813 = ssub.f32 %s786, %s774
        %s814 = smul.f32 %s812, %s813
        %s815 = ssub.f32 %s811, %s814
        %s816 = sand.u32 2147483647, %s815
        %p817 = scmp.gt.f32.partialorder %s816, 1e-08
        %s818 = scalar_select %p817, %s815, 1.0
        %v819 = vstv %s818
        %v820 = vrcp.pop %v819
        %s821 = vtos %v820
        %s822 = scalar_select %p817, %s821, 0.0
        %s823 = ssub.f32 %s782, %s788
        %s824 = smul.f32 %s823, %s822
        %s825 = ssub.f32 %s786, %s780
        %s826 = smul.f32 %s825, %s822
        %s827 = smul.f32 %s780, %s788
        %s828 = smul.f32 %s782, %s786
        %s829 = ssub.f32 %s827, %s828
        %s830 = smul.f32 %s829, %s822
        %s831 = scalar_select %p817, %s830, -1.0
        %s832 = smul.f32 %s810, %s822
        %s833 = ssub.f32 %s774, %s786
        %s834 = smul.f32 %s833, %s822
        %s835 = smul.f32 %s786, %s776
        %s836 = smul.f32 %s788, %s774
        %s837 = ssub.f32 %s835, %s836
        %s838 = smul.f32 %s837, %s822
        %s839 = ssub.f32 %s778, %s790
        %s840 = ssub.f32 %s784, %s790
        %s841 = ssub.f32 %s792, %s804
        %s842 = ssub.f32 %s798, %s804
        %s843 = ssub.f32 %s794, %s806
        %s844 = ssub.f32 %s800, %s806
        %s845 = ssub.f32 %s796, %s808
        %s846 = ssub.f32 %s802, %s808
        %v847 = vstv %s824
        %v848 = vmul.f32 %v847, %v120
        %v849 = vstv %s826
        %v850 = vmul.f32 %v849, %v123
        %v851 = vadd.f32 %v848, %v850
        %v852 = vstv %s831
        %v853 = vadd.f32 %v851, %v852
        %v854 = vstv %s832
        %v855 = vmul.f32 %v854, %v120
        %v856 = vstv %s834
        %v857 = vmul.f32 %v856, %v123
        %v858 = vadd.f32 %v855, %v857
        %v859 = vstv %s838
        %v860 = vadd.f32 %v858, %v859
        %v861 = vsub.f32 1.0, %v853
        %v862 = vsub.f32 %v861, %v860
        %v863 = vmin.f32 %v853, %v860
        %v864 = vmin.f32 %v863, %v862
        %vm865 = vcmp.ge.f32.partialorder %v864, 0.0
        %v866 = vstv %s839
        %v867 = vmul.f32 %v853, %v866
        %v868 = vstv %s840
        %v869 = vmul.f32 %v860, %v868
        %v870 = vadd.f32 %v867, %v869
        %v871 = vstv %s790
        %v872 = vadd.f32 %v870, %v871
        %vm873 = vcmp.lt.f32.partialorder %v872, %v747
        %vm874 = vmand %vm865, %vm873
        %vm875 = vcmp.gt.f32.partialorder %v872, 0.0
        %vm876 = vmand %vm874, %vm875
        %v877 = vsel %vm876, %v872, %v747
        %v878 = vstv %s841
        %v879 = vmul.f32 %v853, %v878
        %v880 = vstv %s842
        %v881 = vmul.f32 %v860, %v880
        %v882 = vadd.f32 %v879, %v881
        %v883 = vstv %s804
        %v884 = vadd.f32 %v882, %v883
        %v885 = vsel %vm876, %v884, %v755
        %v886 = vstv %s843
        %v887 = vmul.f32 %v853, %v886
        %v888 = vstv %s844
        %v889 = vmul.f32 %v860, %v888
        %v890 = vadd.f32 %v887, %v889
        %v891 = vstv %s806
        %v892 = vadd.f32 %v890, %v891
        %v893 = vsel %vm876, %v892, %v763
        %v894 = vstv %s845
        %v895 = vmul.f32 %v853, %v894
        %v896 = vstv %s846
        %v897 = vmul.f32 %v860, %v896
        %v898 = vadd.f32 %v895, %v897
        %v899 = vstv %s808
        %v900 = vadd.f32 %v898, %v899
        %v901 = vsel %vm876, %v900, %v771
        %v902 = vsel %vm876, 1.0, %v772
        %s903 = sadd.s32 %s107, 108
        %s904 = sld [smem:[#allocation2 + %s903]]
        %s905 = sadd.s32 %s107, 109
        %s906 = sld [smem:[#allocation2 + %s905]]
        %s907 = sadd.s32 %s107, 110
        %s908 = sld [smem:[#allocation2 + %s907]]
        %s909 = sadd.s32 %s107, 111
        %s910 = sld [smem:[#allocation2 + %s909]]
        %s911 = sadd.s32 %s107, 112
        %s912 = sld [smem:[#allocation2 + %s911]]
        %s913 = sadd.s32 %s107, 113
        %s914 = sld [smem:[#allocation2 + %s913]]
        %s915 = sadd.s32 %s107, 114
        %s916 = sld [smem:[#allocation2 + %s915]]
        %s917 = sadd.s32 %s107, 115
        %s918 = sld [smem:[#allocation2 + %s917]]
        %s919 = sadd.s32 %s107, 116
        %s920 = sld [smem:[#allocation2 + %s919]]
        %s921 = sadd.s32 %s107, 117
        %s922 = sld [smem:[#allocation2 + %s921]]
        %s923 = sadd.s32 %s107, 118
        %s924 = sld [smem:[#allocation2 + %s923]]
        %s925 = sadd.s32 %s107, 119
        %s926 = sld [smem:[#allocation2 + %s925]]
        %s927 = sadd.s32 %s107, 120
        %s928 = sld [smem:[#allocation2 + %s927]]
        %s929 = sadd.s32 %s107, 121
        %s930 = sld [smem:[#allocation2 + %s929]]
        %s931 = sadd.s32 %s107, 122
        %s932 = sld [smem:[#allocation2 + %s931]]
        %s933 = sadd.s32 %s107, 123
        %s934 = sld [smem:[#allocation2 + %s933]]
        %s935 = sadd.s32 %s107, 124
        %s936 = sld [smem:[#allocation2 + %s935]]
        %s937 = sadd.s32 %s107, 125
        %s938 = sld [smem:[#allocation2 + %s937]]
        %s939 = ssub.f32 %s910, %s904
        %s940 = ssub.f32 %s918, %s906
        %s941 = smul.f32 %s939, %s940
        %s942 = ssub.f32 %s912, %s906
        %s943 = ssub.f32 %s916, %s904
        %s944 = smul.f32 %s942, %s943
        %s945 = ssub.f32 %s941, %s944
        %s946 = sand.u32 2147483647, %s945
        %p947 = scmp.gt.f32.partialorder %s946, 1e-08
        %s948 = scalar_select %p947, %s945, 1.0
        %v949 = vstv %s948
        %v950 = vrcp.pop %v949
        %s951 = vtos %v950
        %s952 = scalar_select %p947, %s951, 0.0
        %s953 = ssub.f32 %s912, %s918
        %s954 = smul.f32 %s953, %s952
        %s955 = ssub.f32 %s916, %s910
        %s956 = smul.f32 %s955, %s952
        %s957 = smul.f32 %s910, %s918
        %s958 = smul.f32 %s912, %s916
        %s959 = ssub.f32 %s957, %s958
        %s960 = smul.f32 %s959, %s952
        %s961 = scalar_select %p947, %s960, -1.0
        %s962 = smul.f32 %s940, %s952
        %s963 = ssub.f32 %s904, %s916
        %s964 = smul.f32 %s963, %s952
        %s965 = smul.f32 %s916, %s906
        %s966 = smul.f32 %s918, %s904
        %s967 = ssub.f32 %s965, %s966
        %s968 = smul.f32 %s967, %s952
        %s969 = ssub.f32 %s908, %s920
        %s970 = ssub.f32 %s914, %s920
        %s971 = ssub.f32 %s922, %s934
        %s972 = ssub.f32 %s928, %s934
        %s973 = ssub.f32 %s924, %s936
        %s974 = ssub.f32 %s930, %s936
        %s975 = ssub.f32 %s926, %s938
        %s976 = ssub.f32 %s932, %s938
        %v977 = vstv %s954
        %v978 = vmul.f32 %v977, %v120
        %v979 = vstv %s956
        %v980 = vmul.f32 %v979, %v123
        %v981 = vadd.f32 %v978, %v980
        %v982 = vstv %s961
        %v983 = vadd.f32 %v981, %v982
        %v984 = vstv %s962
        %v985 = vmul.f32 %v984, %v120
        %v986 = vstv %s964
        %v987 = vmul.f32 %v986, %v123
        %v988 = vadd.f32 %v985, %v987
        %v989 = vstv %s968
        %v990 = vadd.f32 %v988, %v989
        %v991 = vsub.f32 1.0, %v983
        %v992 = vsub.f32 %v991, %v990
        %v993 = vmin.f32 %v983, %v990
        %v994 = vmin.f32 %v993, %v992
        %vm995 = vcmp.ge.f32.partialorder %v994, 0.0
        %v996 = vstv %s969
        %v997 = vmul.f32 %v983, %v996
        %v998 = vstv %s970
        %v999 = vmul.f32 %v990, %v998
        %v1000 = vadd.f32 %v997, %v999
        %v1001 = vstv %s920
        %v1002 = vadd.f32 %v1000, %v1001
        %vm1003 = vcmp.lt.f32.partialorder %v1002, %v877
        %vm1004 = vmand %vm995, %vm1003
        %vm1005 = vcmp.gt.f32.partialorder %v1002, 0.0
        %vm1006 = vmand %vm1004, %vm1005
        %v1007 = vsel %vm1006, %v1002, %v877
        %v1008 = vstv %s971
        %v1009 = vmul.f32 %v983, %v1008
        %v1010 = vstv %s972
        %v1011 = vmul.f32 %v990, %v1010
        %v1012 = vadd.f32 %v1009, %v1011
        %v1013 = vstv %s934
        %v1014 = vadd.f32 %v1012, %v1013
        %v1015 = vsel %vm1006, %v1014, %v885
        %v1016 = vstv %s973
        %v1017 = vmul.f32 %v983, %v1016
        %v1018 = vstv %s974
        %v1019 = vmul.f32 %v990, %v1018
        %v1020 = vadd.f32 %v1017, %v1019
        %v1021 = vstv %s936
        %v1022 = vadd.f32 %v1020, %v1021
        %v1023 = vsel %vm1006, %v1022, %v893
        %v1024 = vstv %s975
        %v1025 = vmul.f32 %v983, %v1024
        %v1026 = vstv %s976
        %v1027 = vmul.f32 %v990, %v1026
        %v1028 = vadd.f32 %v1025, %v1027
        %v1029 = vstv %s938
        %v1030 = vadd.f32 %v1028, %v1029
        %v1031 = vsel %vm1006, %v1030, %v901
        %v1032 = vsel %vm1006, 1.0, %v902
        %s1033 = sadd.s32 %s107, 126
        %s1034 = sld [smem:[#allocation2 + %s1033]]
        %s1035 = sadd.s32 %s107, 127
        %s1036 = sld [smem:[#allocation2 + %s1035]]
        %s1037 = sadd.s32 %s107, 128
        %s1038 = sld [smem:[#allocation2 + %s1037]]
        %s1039 = sadd.s32 %s107, 129
        %s1040 = sld [smem:[#allocation2 + %s1039]]
        %s1041 = sadd.s32 %s107, 130
        %s1042 = sld [smem:[#allocation2 + %s1041]]
        %s1043 = sadd.s32 %s107, 131
        %s1044 = sld [smem:[#allocation2 + %s1043]]
        %s1045 = sadd.s32 %s107, 132
        %s1046 = sld [smem:[#allocation2 + %s1045]]
        %s1047 = sadd.s32 %s107, 133
        %s1048 = sld [smem:[#allocation2 + %s1047]]
        %s1049 = sadd.s32 %s107, 134
        %s1050 = sld [smem:[#allocation2 + %s1049]]
        %s1051 = sadd.s32 %s107, 135
        %s1052 = sld [smem:[#allocation2 + %s1051]]
        %s1053 = sadd.s32 %s107, 136
        %s1054 = sld [smem:[#allocation2 + %s1053]]
        %s1055 = sadd.s32 %s107, 137
        %s1056 = sld [smem:[#allocation2 + %s1055]]
        %s1057 = sadd.s32 %s107, 138
        %s1058 = sld [smem:[#allocation2 + %s1057]]
        %s1059 = sadd.s32 %s107, 139
        %s1060 = sld [smem:[#allocation2 + %s1059]]
        %s1061 = sadd.s32 %s107, 140
        %s1062 = sld [smem:[#allocation2 + %s1061]]
        %s1063 = sadd.s32 %s107, 141
        %s1064 = sld [smem:[#allocation2 + %s1063]]
        %s1065 = sadd.s32 %s107, 142
        %s1066 = sld [smem:[#allocation2 + %s1065]]
        %s1067 = sadd.s32 %s107, 143
        %s1068 = sld [smem:[#allocation2 + %s1067]]
        %s1069 = ssub.f32 %s1040, %s1034
        %s1070 = ssub.f32 %s1048, %s1036
        %s1071 = smul.f32 %s1069, %s1070
        %s1072 = ssub.f32 %s1042, %s1036
        %s1073 = ssub.f32 %s1046, %s1034
        %s1074 = smul.f32 %s1072, %s1073
        %s1075 = ssub.f32 %s1071, %s1074
        %s1076 = sand.u32 2147483647, %s1075
        %p1077 = scmp.gt.f32.partialorder %s1076, 1e-08
        %s1078 = scalar_select %p1077, %s1075, 1.0
        %v1079 = vstv %s1078
        %v1080 = vrcp.pop %v1079
        %s1081 = vtos %v1080
        %s1082 = scalar_select %p1077, %s1081, 0.0
        %s1083 = ssub.f32 %s1042, %s1048
        %s1084 = smul.f32 %s1083, %s1082
        %s1085 = ssub.f32 %s1046, %s1040
        %s1086 = smul.f32 %s1085, %s1082
        %s1087 = smul.f32 %s1040, %s1048
        %s1088 = smul.f32 %s1042, %s1046
        %s1089 = ssub.f32 %s1087, %s1088
        %s1090 = smul.f32 %s1089, %s1082
        %s1091 = scalar_select %p1077, %s1090, -1.0
        %s1092 = smul.f32 %s1070, %s1082
        %s1093 = ssub.f32 %s1034, %s1046
        %s1094 = smul.f32 %s1093, %s1082
        %s1095 = smul.f32 %s1046, %s1036
        %s1096 = smul.f32 %s1048, %s1034
        %s1097 = ssub.f32 %s1095, %s1096
        %s1098 = smul.f32 %s1097, %s1082
        %s1099 = ssub.f32 %s1038, %s1050
        %s1100 = ssub.f32 %s1044, %s1050
        %s1101 = ssub.f32 %s1052, %s1064
        %s1102 = ssub.f32 %s1058, %s1064
        %s1103 = ssub.f32 %s1054, %s1066
        %s1104 = ssub.f32 %s1060, %s1066
        %s1105 = ssub.f32 %s1056, %s1068
        %s1106 = ssub.f32 %s1062, %s1068
        %v1107 = vstv %s1084
        %v1108 = vmul.f32 %v1107, %v120
        %v1109 = vstv %s1086
        %v1110 = vmul.f32 %v1109, %v123
        %v1111 = vadd.f32 %v1108, %v1110
        %v1112 = vstv %s1091
        %v1113 = vadd.f32 %v1111, %v1112
        %v1114 = vstv %s1092
        %v1115 = vmul.f32 %v1114, %v120
        %v1116 = vstv %s1094
        %v1117 = vmul.f32 %v1116, %v123
        %v1118 = vadd.f32 %v1115, %v1117
        %v1119 = vstv %s1098
        %v1120 = vadd.f32 %v1118, %v1119
        %v1121 = vsub.f32 1.0, %v1113
        %v1122 = vsub.f32 %v1121, %v1120
        %v1123 = vmin.f32 %v1113, %v1120
        %v1124 = vmin.f32 %v1123, %v1122
        %vm1125 = vcmp.ge.f32.partialorder %v1124, 0.0
        %v1126 = vstv %s1099
        %v1127 = vmul.f32 %v1113, %v1126
        %v1128 = vstv %s1100
        %v1129 = vmul.f32 %v1120, %v1128
        %v1130 = vadd.f32 %v1127, %v1129
        %v1131 = vstv %s1050
        %v1132 = vadd.f32 %v1130, %v1131
        %vm1133 = vcmp.lt.f32.partialorder %v1132, %v1007
        %vm1134 = vmand %vm1125, %vm1133
        %vm1135 = vcmp.gt.f32.partialorder %v1132, 0.0
        %vm1136 = vmand %vm1134, %vm1135
        %v1137 = vstv %s1101
        %v1138 = vmul.f32 %v1113, %v1137
        %v1139 = vstv %s1102
        %v1140 = vmul.f32 %v1120, %v1139
        %v1141 = vadd.f32 %v1138, %v1140
        %v1142 = vstv %s1064
        %v1143 = vadd.f32 %v1141, %v1142
        %v1144 = vsel %vm1136, %v1143, %v1015
        %v1145 = vstv %s1103
        %v1146 = vmul.f32 %v1113, %v1145
        %v1147 = vstv %s1104
        %v1148 = vmul.f32 %v1120, %v1147
        %v1149 = vadd.f32 %v1146, %v1148
        %v1150 = vstv %s1066
        %v1151 = vadd.f32 %v1149, %v1150
        %v1152 = vsel %vm1136, %v1151, %v1023
        %v1153 = vstv %s1105
        %v1154 = vmul.f32 %v1113, %v1153
        %v1155 = vstv %s1106
        %v1156 = vmul.f32 %v1120, %v1155
        %v1157 = vadd.f32 %v1154, %v1156
        %v1158 = vstv %s1068
        %v1159 = vadd.f32 %v1157, %v1158
        %v1160 = vsel %vm1136, %v1159, %v1031
        %v1161 = vsel %vm1136, 1.0, %v1032
        %v1163 = vrot.slane %v1152, 6
        %v1166 = vrot.slane %v1160, 4
        %v1169 = vrot.slane %v1161, 2
        %vm1171 = vcmask 1041408
        %v1172 = vsel %vm1171, %v1144, %v1163
        %vm1173 = vcmask 1043456
        %v1174 = vsel %vm1173, %v1172, %v1166
        %vm1175 = vcmask 1045504
        %v1176 = vsel %vm1175, %v1174, %v1169
        %1177 = vst [vmem:[%s106] sm:$0xff] %v1176
        %s1178 = sand.u32 %s45, 1
        %s1179 = scalar_lea.sflag [#allocation3], %s1178
        %s1180 = sand.u32 %s45, 1
        %s1181 = smul.addr %s1180, 8
        %s1182 = scalar_lea.vmem [#allocation5], %s1181
        // Predicated region
        $region29: #{tpu_custom_call.1} parent=23 // pred_check
          %p1183 = pneg %p55
        $region30: #{tpu_custom_call.1} parent=23 // pred_check_branch
          %1185 = sbr.rel (%p1183) target = $region32
        $region31: #{tpu_custom_call.1} parent=23 // pred_region
          %s1187 = ssub.s32 128, 128
          %1188 = vsyncadd %s1179, %s1187
          %s1189 = smul.addr %s16, 128
          %s1190 = scalar_lea.hbm %s1, %s1189
          %s1192 = sshll.u32 %s1182, 4
          %s1193 = int_to_ptr.vmem [resolvable:$true] %s1192
          %1195 = dma.vmem_to_hbm [thread:$0]  %s1193, 128, %s1190, %s1179
        $region32: #{tpu_custom_call.1} parent=23 // pred_fallthru
          _
      $region24: #{tpu_custom_call.1} parent=5 // pred_fallthru
        _
      %p1196 = scmp.le.s32.totalorder 2, %s11
      // Predicated region
      $region33: #{tpu_custom_call.1} parent=5 // pred_check
        %p1197 = pneg %p1196
      $region34: #{tpu_custom_call.1} parent=5 // pred_check_branch
        %1199 = sbr.rel (%p1197) target = $region36
      $region35: #{tpu_custom_call.1} parent=5 // pred_region
        %s1200 = ssub.s32 %s11, 2
        // Predicated region
        $region37: #{tpu_custom_call.1} parent=35 // pred_check
          %p1201 = pneg %p61
        $region38: #{tpu_custom_call.1} parent=35 // pred_check_branch
          %1203 = sbr.rel (%p1201) target = $region40
        $region39: #{tpu_custom_call.1} parent=35 // pred_region
          %s1204 = sand.u32 %s46, 1
          %s1205 = scalar_lea.sflag [#allocation3], %s1204
          %s1206 = sand.u32 %s46, 1
          %s1207 = smul.addr %s1206, 8
          %s1208 = scalar_lea.vmem [#allocation5], %s1207
          %1209 = dma.done %s1205, 128
        $region40: #{tpu_custom_call.1} parent=35 // pred_fallthru
          _
      $region36: #{tpu_custom_call.1} parent=5 // pred_fallthru
        _
    $region6: #{tpu_custom_call.1} parent=1 // loop_footer
      %s15 = sadd.s32 1, %s11
    $region7: #{tpu_custom_call.1} parent=1 // loop_footer_branch
      %10 = sbr.rel target = $region3
    $region8: #{tpu_custom_call.1} parent=1 // loop_exit
      _
    %1210 = vsyncpa [#allocation3], 1
    %s1211 = scalar_lea.sflag [#allocation3], 1
    %1212 = vsyncpa %s1211, 1
    %1213 = vsyncpa [#allocation4], 1
    %s1214 = scalar_lea.sflag [#allocation4], 1
    %1215 = vsyncpa %s1214, 1

</llo_original>
